<compile_context>
chip_gen: v5e
topology: v5e:2x2
jax: 0.10.0
libtpu: 0.0.40
codegen_flags: <defaults>
</compile_context>

<pallas_src>
import jax
import jax.numpy as jnp
from jax.experimental import pallas as pl
from jax.experimental.pallas import tpu as pltpu

H = 1024       # hidden size fixed by the module (torch.nn.Linear(1024, ...))
SE_LANES = 128 # lane-dense width of the fused start|end output slab


def _sigmoid(z):
    # 1 / (1 + exp(-z)) -- exp goes to the EUP, rest is VPU.
    return 1.0 / (1.0 + jnp.exp(-z))


def dom_trigger_kernel(rep_ref, mask_ref,
                       wenc_ref, benc_ref,
                       wheads_ref, bheads_ref,
                       se_ref, span_ref,
                       acc_ref):
    # rep_ref:    (1, S, tk)  f32   encoder output chunk (cast to bf16 in-kernel)
    # mask_ref:   (1, S, S)   f32   span_mask for this batch element (0 = masked)
    # wenc_ref:   (tk, H)     bf16  encoder_linear weight chunk ([in, out] layout)
    # benc_ref:   (1, H)      f32
    # wheads_ref: (H, 8)      bf16  [start(2) | end(2) | span1(1) | span2(1) | pad(2)]
    # bheads_ref: (1, 8)      f32   (span / pad columns are zero)
    # se_ref:     (1, S, 128) f32   lane-dense slab: [start(2) | end(2) | zero pad]
    # span_ref:   (1, S, S)   f32
    # acc_ref:    (S, H)      f32   encoder matmul accumulator (scratch)
    k = pl.program_id(1)

    @pl.when(k == 0)
    def _init():
        acc_ref[...] = jnp.zeros_like(acc_ref)

    # Partial encoder_linear matmul: [S, tk] x [tk, H], bf16 MXU, f32 accumulate.
    x = rep_ref[0].astype(jnp.bfloat16)
    acc_ref[...] += jnp.dot(x, wenc_ref[...], preferred_element_type=jnp.float32)

    @pl.when(k == pl.num_programs(1) - 1)
    def _finalize():
        S = se_ref.shape[1]
        lanes = se_ref.shape[2]

        # encoder_linear bias + Tanh (f32 VPU), then fused 8-wide head matmul.
        h = jnp.tanh(acc_ref[...] + benc_ref[...])                     # [S, H]
        heads = (jnp.dot(h.astype(jnp.bfloat16), wheads_ref[...],
                         preferred_element_type=jnp.float32)
                 + bheads_ref[...])                                    # [S, 8]

        # start / end 2-way softmaxes via the sigmoid identity:
        # softmax([a, b]) = [sigmoid(a - b), sigmoid(b - a)]  (exactly normalized).
        d_start = heads[:, 0:1] - heads[:, 1:2]                        # [S, 1]
        d_end = heads[:, 2:3] - heads[:, 3:4]                          # [S, 1]
        se4 = jnp.concatenate(
            [_sigmoid(d_start), _sigmoid(-d_start),
             _sigmoid(d_end), _sigmoid(-d_end)], axis=-1)              # [S, 4]
        # Single lane-dense store (128 wide, zero padded); sliced in the wrapper.
        se_ref[0] = jnp.concatenate(
            [se4, jnp.zeros((S, lanes - 4), jnp.float32)], axis=-1)

        # span logits: span1 (column) + span2 (row), mask, exact softmax.
        s1 = heads[:, 4:5]                                             # [S, 1]
        s2 = jnp.transpose(heads[:, 5:6])                              # [1, S]
        span_logits = s1 + s2                                          # [S, S]
        masked = jnp.where(mask_ref[0] == 0.0, jnp.float32(-1e30), span_logits)
        m = jnp.max(masked, axis=-1, keepdims=True)
        e = jnp.exp(masked - m)
        # Exact divide so rows sum to 1 (avoids approx-reciprocal drift).
        span_ref[0] = e / jnp.sum(e, axis=-1, keepdims=True)


def dom_trigger_forward(encoder_rep, span_mask, params, *, tk=256):
    """encoder_rep: [B, S, H] f32, span_mask: [B, S, S] (0 = masked)."""
    B, S, Hh = encoder_rep.shape
    assert Hh % tk == 0
    nk = Hh // tk
    wenc, benc, wheads, bheads = params

    out_shapes = (
        jax.ShapeDtypeStruct((B, S, SE_LANES), jnp.float32),  # start(0:2) | end(2:4)
        jax.ShapeDtypeStruct((B, S, S), jnp.float32),         # span_prob
    )
    grid_spec = pltpu.PrefetchScalarGridSpec(
        num_scalar_prefetch=0,
        grid=(B, nk),                                   # (parallel batch, K reduction)
        in_specs=[
            pl.BlockSpec((1, S, tk), lambda b, k: (b, 0, k)),   # rep chunk (f32)
            pl.BlockSpec((1, S, S), lambda b, k: (b, 0, 0)),    # span_mask (f32)
            pl.BlockSpec((tk, Hh), lambda b, k: (k, 0)),        # W_enc chunk (bf16)
            pl.BlockSpec((1, Hh), lambda b, k: (0, 0)),         # b_enc (f32)
            pl.BlockSpec((Hh, 8), lambda b, k: (0, 0)),         # fused head W (bf16)
            pl.BlockSpec((1, 8), lambda b, k: (0, 0)),          # fused head b (f32)
        ],
        out_specs=[
            pl.BlockSpec((1, S, SE_LANES), lambda b, k: (b, 0, 0)),
            pl.BlockSpec((1, S, S), lambda b, k: (b, 0, 0)),
        ],
        scratch_shapes=[pltpu.VMEM((S, Hh), jnp.float32)],      # encoder acc
    )
    se_p, span_p = pl.pallas_call(
        dom_trigger_kernel,
        out_shape=out_shapes,
        grid_spec=grid_spec,
        compiler_params=pltpu.CompilerParams(
            dimension_semantics=("parallel", "arbitrary"),
            # Actual working set ~1.3 MiB (double-buffered blocks) + 32 KiB
            # scratch; 16 MiB leaves ample headroom on v5e/v6e/v7x.
            vmem_limit_bytes=16 << 20),
    )(encoder_rep, span_mask, wenc, benc, wheads, bheads)

    return se_p[..., 0:2], se_p[..., 2:4], span_p


def ref_forward(rep, mask, params):
    """Pure-JAX f32 reference mirroring the PyTorch forward (post-encoder)."""
    wenc, benc, wheads, bheads = params
    h = jnp.tanh(rep @ wenc.astype(jnp.float32) + benc[0])
    heads = h @ wheads.astype(jnp.float32) + bheads[0]
    start = jax.nn.softmax(heads[..., 0:2], axis=-1)
    end = jax.nn.softmax(heads[..., 2:4], axis=-1)
    span = heads[..., 4:5] + heads[..., 5][:, None, :]
    span = jnp.where(mask == 0, jnp.float32(-1e30), span)
    return start, end, jax.nn.softmax(span, axis=-1)


if __name__ == "__main__":
    key = jax.random.PRNGKey(0)
    ks = jax.random.split(key, 10)

    B, S, VOCAB = 2, 8, 100

    # Synthetic stand-in for the RoBERTa/BERT encoder output.
    tok_emb = jax.random.normal(ks[0], (VOCAB, H), jnp.float32) * 0.02
    seg_emb = jax.random.normal(ks[1], (2, H), jnp.float32) * 0.02

    input_ids = jax.random.randint(ks[2], (B, S), 0, VOCAB)
    input_mask = jnp.ones((B, S), jnp.float32)
    input_seg = jnp.zeros((B, S), jnp.int32)
    encoder_rep = (tok_emb[input_ids] + seg_emb[input_seg]) * input_mask[..., None]

    # span_mask (0 = masked); keep at least one valid entry per row so the
    # masked softmax is well-defined (as the real model guarantees).
    span_mask = (jax.random.uniform(ks[3], (B, S, S)) > 0.3).astype(jnp.float32)
    span_mask = span_mask.at[:, :, 0].set(1.0)

    # Parameters (shapes from the module's __init__), [in, out] layout.
    # Weights feeding the MXU stored as bf16; biases stay f32.
    wenc = (jax.random.normal(ks[4], (H, H), jnp.float32) * 0.02).astype(jnp.bfloat16)
    benc = jax.random.normal(ks[5], (1, H), jnp.float32) * 0.02
    wse = jax.random.normal(ks[6], (H, 4), jnp.float32) * 0.02      # start(2) | end(2)
    w12 = jax.random.normal(ks[7], (H, 2), jnp.float32) * 0.02      # span1(1) | span2(1)
    # Fused head weight [H, 8] = start|end|span1|span2|zero-pad.
    wheads = jnp.concatenate(
        [wse, w12, jnp.zeros((H, 2), jnp.float32)], axis=1).astype(jnp.bfloat16)
    bse = jax.random.normal(ks[8], (1, 4), jnp.float32) * 0.02      # start/end biases
    bheads = jnp.concatenate([bse, jnp.zeros((1, 4), jnp.float32)], axis=1)
    params = (wenc, benc, wheads, bheads)

    start_p, end_p, span_p = dom_trigger_forward(encoder_rep, span_mask, params)
    jax.block_until_ready((start_p, end_p, span_p))

    # Correctness check (bf16 MXU operands -> relaxed tolerance).
    r_start, r_end, r_span = ref_forward(encoder_rep, span_mask, params)
    assert jnp.allclose(start_p, r_start, atol=1e-2, rtol=1e-2)
    assert jnp.allclose(end_p, r_end, atol=1e-2, rtol=1e-2)
    assert jnp.allclose(span_p, r_span, atol=1e-2, rtol=1e-2)

    print("KERNEL_OK")
</pallas_src>

<mosaic_0001>
module attributes {stable_mosaic.version = 11 : i64} {
  func.func @dom_trigger_kernel(%arg0: i32, %arg1: i32, %arg2: memref<1x8x256xf32, #tpu.memory_space<vmem>>, %arg3: memref<1x8x8xf32, #tpu.memory_space<vmem>>, %arg4: memref<256x1024xbf16, #tpu.memory_space<vmem>>, %arg5: memref<1x1024xf32, #tpu.memory_space<vmem>>, %arg6: memref<1024x8xbf16, #tpu.memory_space<vmem>>, %arg7: memref<1x8xf32, #tpu.memory_space<vmem>>, %arg8: memref<1x8x128xf32, #tpu.memory_space<vmem>>, %arg9: memref<1x8x8xf32, #tpu.memory_space<vmem>>, %arg10: memref<8x1024xf32, #tpu.memory_space<vmem>>) attributes {dimension_semantics = [#tpu.dimension_semantics<parallel>, #tpu.dimension_semantics<arbitrary>], iteration_bounds = array<i64: 2, 4>, scalar_prefetch = 0 : i64, scratch_operands = 1 : i64, tpu.core_type = #tpu.core_type<tc>, window_params = [{transform_indices = @transform_0, window_bounds = array<i64: 1, 8, 256>}, {transform_indices = @transform_1, window_bounds = array<i64: 1, 8, 8>}, {transform_indices = @transform_2, window_bounds = array<i64: 256, 1024>}, {pipeline_mode = #tpu.pipeline_mode<synchronous>, transform_indices = @transform_3, window_bounds = array<i64: 1, 1024>}, {pipeline_mode = #tpu.pipeline_mode<synchronous>, transform_indices = @transform_4, window_bounds = array<i64: 1024, 8>}, {pipeline_mode = #tpu.pipeline_mode<synchronous>, transform_indices = @transform_5, window_bounds = array<i64: 1, 8>}, {transform_indices = @transform_6, window_bounds = array<i64: 1, 8, 128>}, {transform_indices = @transform_7, window_bounds = array<i64: 1, 8, 8>}]} {
    %c0_i32 = arith.constant 0 : i32
    %0 = arith.cmpi eq, %arg1, %c0_i32 : i32
    %1 = arith.extui %0 : i1 to i32
    %c0_i32_0 = arith.constant 0 : i32
    %2 = arith.cmpi ne, %1, %c0_i32_0 : i32
    scf.if %2 {
      %cst_10 = arith.constant 0.000000e+00 : f32
      %14 = vector.broadcast %cst_10 : f32 to vector<8x1024xf32>
      %c0_11 = arith.constant 0 : index
      %c0_12 = arith.constant 0 : index
      %15 = vector.load %arg10[%c0_11, %c0_12] : memref<8x1024xf32, #tpu.memory_space<vmem>>, vector<8x1024xf32>
      tpu.vector_store %arg10[%c0_11, %c0_12], %14 {strides = array<i32>} : memref<8x1024xf32, #tpu.memory_space<vmem>>, vector<8x1024xf32>,
    } else {
    }
    %c0 = arith.constant 0 : index
    %c0_1 = arith.constant 0 : index
    %c0_2 = arith.constant 0 : index
    %3 = vector.load %arg2[%c0, %c0_1, %c0_2] : memref<1x8x256xf32, #tpu.memory_space<vmem>>, vector<1x8x256xf32>
    %4 = vector.shape_cast %3 : vector<1x8x256xf32> to vector<8x256xf32>
    %5 = arith.truncf %4 : vector<8x256xf32> to vector<8x256xbf16>
    %c0_3 = arith.constant 0 : index
    %c0_4 = arith.constant 0 : index
    %6 = vector.load %arg10[%c0_3, %c0_4] : memref<8x1024xf32, #tpu.memory_space<vmem>>, vector<8x1024xf32>
    %c0_5 = arith.constant 0 : index
    %c0_6 = arith.constant 0 : index
    %7 = vector.load %arg4[%c0_5, %c0_6] : memref<256x1024xbf16, #tpu.memory_space<vmem>>, vector<256x1024xbf16>
    %cst = arith.constant dense<0.000000e+00> : vector<8x1024xf32>
    %8 = tpu.matmul %5, %7, %cst {dimension_numbers = #tpu.dot_dimension_numbers<[1], [0], [0], [1], [0, 0, 1, 1], [], []>} : vector<8x256xbf16>, vector<256x1024xbf16>, vector<8x1024xf32> -> vector<8x1024xf32>
    %9 = arith.addf %6, %8 : vector<8x1024xf32>
    %c0_7 = arith.constant 0 : index
    %c0_8 = arith.constant 0 : index
    %10 = vector.load %arg10[%c0_7, %c0_8] : memref<8x1024xf32, #tpu.memory_space<vmem>>, vector<8x1024xf32>
    tpu.vector_store %arg10[%c0_7, %c0_8], %9 {strides = array<i32>} : memref<8x1024xf32, #tpu.memory_space<vmem>>, vector<8x1024xf32>,
    %c3_i32 = arith.constant 3 : i32
    %11 = arith.cmpi eq, %arg1, %c3_i32 : i32
    %12 = arith.extui %11 : i1 to i32
    %c0_i32_9 = arith.constant 0 : i32
    %13 = arith.cmpi ne, %12, %c0_i32_9 : i32
    scf.if %13 {
      %c0_10 = arith.constant 0 : index
      %c0_11 = arith.constant 0 : index
      %14 = vector.load %arg10[%c0_10, %c0_11] : memref<8x1024xf32, #tpu.memory_space<vmem>>, vector<8x1024xf32>
      %c0_12 = arith.constant 0 : index
      %c0_13 = arith.constant 0 : index
      %15 = vector.load %arg5[%c0_12, %c0_13] : memref<1x1024xf32, #tpu.memory_space<vmem>>, vector<1x1024xf32>
      %16 = vector.broadcast %15 : vector<1x1024xf32> to vector<8x1024xf32>
      %17 = arith.addf %14, %16 : vector<8x1024xf32>
      %18 = math.tanh %17 : vector<8x1024xf32>
      %19 = arith.truncf %18 : vector<8x1024xf32> to vector<8x1024xbf16>
      %c0_14 = arith.constant 0 : index
      %c0_15 = arith.constant 0 : index
      %20 = vector.load %arg6[%c0_14, %c0_15] : memref<1024x8xbf16, #tpu.memory_space<vmem>>, vector<1024x8xbf16>
      %cst_16 = arith.constant dense<0.000000e+00> : vector<8x8xf32>
      %21 = tpu.matmul %19, %20, %cst_16 {dimension_numbers = #tpu.dot_dimension_numbers<[1], [0], [0], [1], [0, 0, 1, 1], [], []>} : vector<8x1024xbf16>, vector<1024x8xbf16>, vector<8x8xf32> -> vector<8x8xf32>
      %c0_17 = arith.constant 0 : index
      %c0_18 = arith.constant 0 : index
      %22 = vector.load %arg7[%c0_17, %c0_18] : memref<1x8xf32, #tpu.memory_space<vmem>>, vector<1x8xf32>
      %23 = vector.broadcast %22 : vector<1x8xf32> to vector<8x8xf32>
      %24 = arith.addf %21, %23 : vector<8x8xf32>
      %25 = vector.extract_strided_slice %24 {offsets = [0, 0], sizes = [8, 1], strides = [1, 1]} : vector<8x8xf32> to vector<8x1xf32>
      %26 = vector.extract_strided_slice %24 {offsets = [0, 1], sizes = [8, 1], strides = [1, 1]} : vector<8x8xf32> to vector<8x1xf32>
      %27 = arith.subf %25, %26 : vector<8x1xf32>
      %28 = vector.extract_strided_slice %24 {offsets = [0, 2], sizes = [8, 1], strides = [1, 1]} : vector<8x8xf32> to vector<8x1xf32>
      %29 = vector.extract_strided_slice %24 {offsets = [0, 3], sizes = [8, 1], strides = [1, 1]} : vector<8x8xf32> to vector<8x1xf32>
      %30 = arith.subf %28, %29 : vector<8x1xf32>
      %cst_19 = arith.constant 0.000000e+00 : f32
      %31 = vector.broadcast %cst_19 : f32 to vector<8x1xf32>
      %32 = arith.subf %31, %27 : vector<8x1xf32>
      %33 = math.exp %32 : vector<8x1xf32>
      %cst_20 = arith.constant 1.000000e+00 : f32
      %34 = vector.broadcast %cst_20 : f32 to vector<8x1xf32>
      %35 = arith.addf %34, %33 : vector<8x1xf32>
      %cst_21 = arith.constant 1.000000e+00 : f32
      %36 = vector.broadcast %cst_21 : f32 to vector<8x1xf32>
      %37 = arith.divf %36, %35 : vector<8x1xf32>
      %cst_22 = arith.constant 0.000000e+00 : f32
      %38 = vector.broadcast %cst_22 : f32 to vector<8x1xf32>
      %39 = arith.subf %38, %27 : vector<8x1xf32>
      %cst_23 = arith.constant 0.000000e+00 : f32
      %40 = vector.broadcast %cst_23 : f32 to vector<8x1xf32>
      %41 = arith.subf %40, %39 : vector<8x1xf32>
      %42 = math.exp %41 : vector<8x1xf32>
      %cst_24 = arith.constant 1.000000e+00 : f32
      %43 = vector.broadcast %cst_24 : f32 to vector<8x1xf32>
      %44 = arith.addf %43, %42 : vector<8x1xf32>
      %cst_25 = arith.constant 1.000000e+00 : f32
      %45 = vector.broadcast %cst_25 : f32 to vector<8x1xf32>
      %46 = arith.divf %45, %44 : vector<8x1xf32>
      %cst_26 = arith.constant 0.000000e+00 : f32
      %47 = vector.broadcast %cst_26 : f32 to vector<8x1xf32>
      %48 = arith.subf %47, %30 : vector<8x1xf32>
      %49 = math.exp %48 : vector<8x1xf32>
      %cst_27 = arith.constant 1.000000e+00 : f32
      %50 = vector.broadcast %cst_27 : f32 to vector<8x1xf32>
      %51 = arith.addf %50, %49 : vector<8x1xf32>
      %cst_28 = arith.constant 1.000000e+00 : f32
      %52 = vector.broadcast %cst_28 : f32 to vector<8x1xf32>
      %53 = arith.divf %52, %51 : vector<8x1xf32>
      %cst_29 = arith.constant 0.000000e+00 : f32
      %54 = vector.broadcast %cst_29 : f32 to vector<8x1xf32>
      %55 = arith.subf %54, %30 : vector<8x1xf32>
      %cst_30 = arith.constant 0.000000e+00 : f32
      %56 = vector.broadcast %cst_30 : f32 to vector<8x1xf32>
      %57 = arith.subf %56, %55 : vector<8x1xf32>
      %58 = math.exp %57 : vector<8x1xf32>
      %cst_31 = arith.constant 1.000000e+00 : f32
      %59 = vector.broadcast %cst_31 : f32 to vector<8x1xf32>
      %60 = arith.addf %59, %58 : vector<8x1xf32>
      %cst_32 = arith.constant 1.000000e+00 : f32
      %61 = vector.broadcast %cst_32 : f32 to vector<8x1xf32>
      %62 = arith.divf %61, %60 : vector<8x1xf32>
      %63 = tpu.concatenate %37, %46, %53, %62 in 1 : vector<8x1xf32>, vector<8x1xf32>, vector<8x1xf32>, vector<8x1xf32> -> vector<8x4xf32>
      %cst_33 = arith.constant 0.000000e+00 : f32
      %64 = vector.broadcast %cst_33 : f32 to vector<8x124xf32>
      %65 = tpu.concatenate %63, %64 in 1 : vector<8x4xf32>, vector<8x124xf32> -> vector<8x128xf32>
      %c0_34 = arith.constant 0 : index
      %c0_35 = arith.constant 0 : index
      %c0_36 = arith.constant 0 : index
      %66 = vector.load %arg8[%c0_34, %c0_35, %c0_36] : memref<1x8x128xf32, #tpu.memory_space<vmem>>, vector<1x8x128xf32>
      %67 = vector.shape_cast %66 : vector<1x8x128xf32> to vector<8x128xf32>
      %68 = vector.shape_cast %65 : vector<8x128xf32> to vector<1x8x128xf32>
      tpu.vector_store %arg8[%c0_34, %c0_35, %c0_36], %68 {strides = array<i32>} : memref<1x8x128xf32, #tpu.memory_space<vmem>>, vector<1x8x128xf32>,
      %69 = vector.extract_strided_slice %24 {offsets = [0, 4], sizes = [8, 1], strides = [1, 1]} : vector<8x8xf32> to vector<8x1xf32>
      %70 = vector.extract_strided_slice %24 {offsets = [0, 5], sizes = [8, 1], strides = [1, 1]} : vector<8x8xf32> to vector<8x1xf32>
      %71 = tpu.transpose %70, [1, 0] : vector<8x1xf32> -> vector<1x8xf32>
      %72 = vector.broadcast %69 : vector<8x1xf32> to vector<8x8xf32>
      %73 = vector.broadcast %71 : vector<1x8xf32> to vector<8x8xf32>
      %74 = arith.addf %72, %73 : vector<8x8xf32>
      %c0_37 = arith.constant 0 : index
      %c0_38 = arith.constant 0 : index
      %c0_39 = arith.constant 0 : index
      %75 = vector.load %arg3[%c0_37, %c0_38, %c0_39] : memref<1x8x8xf32, #tpu.memory_space<vmem>>, vector<1x8x8xf32>
      %76 = vector.shape_cast %75 : vector<1x8x8xf32> to vector<8x8xf32>
      %cst_40 = arith.constant 0.000000e+00 : f32
      %77 = vector.broadcast %cst_40 : f32 to vector<8x8xf32>
      %78 = arith.cmpf oeq, %76, %77 : vector<8x8xf32>
      %cst_41 = arith.constant -1.000000e+30 : f32
      %79 = vector.broadcast %cst_41 : f32 to vector<8x8xf32>
      %80 = arith.select %78, %79, %74 : vector<8x8xi1>, vector<8x8xf32>
      %cst_42 = arith.constant dense<0xFF800000> : vector<8xf32>
      %81 = vector.multi_reduction <maximumf>, %80, %cst_42 [1] : vector<8x8xf32> to vector<8xf32>
      %82 = vector.shape_cast %81 : vector<8xf32> to vector<8x1xf32>
      %83 = vector.broadcast %82 : vector<8x1xf32> to vector<8x8xf32>
      %84 = arith.subf %80, %83 : vector<8x8xf32>
      %85 = math.exp %84 : vector<8x8xf32>
      %cst_43 = arith.constant dense<0.000000e+00> : vector<8xf32>
      %86 = vector.multi_reduction <add>, %85, %cst_43 [1] : vector<8x8xf32> to vector<8xf32>
      %87 = vector.shape_cast %86 : vector<8xf32> to vector<8x1xf32>
      %88 = vector.broadcast %87 : vector<8x1xf32> to vector<8x8xf32>
      %89 = arith.divf %85, %88 : vector<8x8xf32>
      %c0_44 = arith.constant 0 : index
      %c0_45 = arith.constant 0 : index
      %c0_46 = arith.constant 0 : index
      %90 = vector.load %arg9[%c0_44, %c0_45, %c0_46] : memref<1x8x8xf32, #tpu.memory_space<vmem>>, vector<1x8x8xf32>
      %91 = vector.shape_cast %90 : vector<1x8x8xf32> to vector<8x8xf32>
      %92 = vector.shape_cast %89 : vector<8x8xf32> to vector<1x8x8xf32>
      tpu.vector_store %arg9[%c0_44, %c0_45, %c0_46], %92 {strides = array<i32>} : memref<1x8x8xf32, #tpu.memory_space<vmem>>, vector<1x8x8xf32>,
    } else {
    }
    return
  }
  func.func @transform_0(%arg0: i32, %arg1: i32) -> (i32, i32, i32) {
    %c0_i32 = arith.constant 0 : i32
    %c0_i32_0 = arith.constant 0 : i32
    return %arg0, %c0_i32, %arg1 : i32, i32, i32
  }
  func.func @transform_1(%arg0: i32, %arg1: i32) -> (i32, i32, i32) {
    %c0_i32 = arith.constant 0 : i32
    %c0_i32_0 = arith.constant 0 : i32
    %c0_i32_1 = arith.constant 0 : i32
    return %arg0, %c0_i32, %c0_i32_0 : i32, i32, i32
  }
  func.func @transform_2(%arg0: i32, %arg1: i32) -> (i32, i32) {
    %c0_i32 = arith.constant 0 : i32
    %c0_i32_0 = arith.constant 0 : i32
    return %arg1, %c0_i32 : i32, i32
  }
  func.func @transform_3(%arg0: i32, %arg1: i32) -> (i32, i32) {
    %c0_i32 = arith.constant 0 : i32
    %c0_i32_0 = arith.constant 0 : i32
    %c0_i32_1 = arith.constant 0 : i32
    return %c0_i32, %c0_i32_0 : i32, i32
  }
  func.func @transform_4(%arg0: i32, %arg1: i32) -> (i32, i32) {
    %c0_i32 = arith.constant 0 : i32
    %c0_i32_0 = arith.constant 0 : i32
    %c0_i32_1 = arith.constant 0 : i32
    return %c0_i32, %c0_i32_0 : i32, i32
  }
  func.func @transform_5(%arg0: i32, %arg1: i32) -> (i32, i32) {
    %c0_i32 = arith.constant 0 : i32
    %c0_i32_0 = arith.constant 0 : i32
    %c0_i32_1 = arith.constant 0 : i32
    return %c0_i32, %c0_i32_0 : i32, i32
  }
  func.func @transform_6(%arg0: i32, %arg1: i32) -> (i32, i32, i32) {
    %c0_i32 = arith.constant 0 : i32
    %c0_i32_0 = arith.constant 0 : i32
    %c0_i32_1 = arith.constant 0 : i32
    return %arg0, %c0_i32, %c0_i32_0 : i32, i32, i32
  }
  func.func @transform_7(%arg0: i32, %arg1: i32) -> (i32, i32, i32) {
    %c0_i32 = arith.constant 0 : i32
    %c0_i32_0 = arith.constant 0 : i32
    %c0_i32_1 = arith.constant 0 : i32
    return %arg0, %c0_i32, %c0_i32_0 : i32, i32, i32
  }
}

</mosaic_0001>

<llo_original>
// kernel: tpu_custom_call.1
$region0: #{tpu_custom_call.1}
  #allocation0 [shape = 'u32[]', space=smem, size = 0x4, offset = 0x4, fixed_abs, tag = 'smem constant byte address 0x4 - core index']
  #allocation1 [shape = 'u32[72,128]{1,0:T(1,128)}', space=vmem, size = 0x9000, scoped, tag = 'internal scratch']
  #allocation2 [shape = 'f32[8,1024]{1,0:T(8,128)}', space=vmem, size = 0x8000, scoped, tag = 'scratch operand']
  %s0 = inlined_call_operand.hbm [shape: f32[2,8,1024], index: 0, kind: input, shape index: {}]
  %s1 = inlined_call_operand.hbm [shape: f32[2,8,8], index: 1, kind: input, shape index: {}]
  %s2 = inlined_call_operand.hbm [shape: bf16[1024,1024], index: 2, kind: input, shape index: {}]
  %s3 = inlined_call_operand.hbm [shape: f32[1,1024], index: 3, kind: input, shape index: {}]
  %s4 = inlined_call_operand.vmem [shape: bf16[1024,8], index: 4, kind: input, shape index: {}]
  %s5 = inlined_call_operand.hbm [shape: f32[1,8], index: 5, kind: input, shape index: {}]
  %s6 = inlined_call_operand.hbm [shape: f32[2,8,128], index: 6, kind: output, shape index: {0}]
  %s7 = inlined_call_operand.hbm [shape: f32[2,8,8], index: 7, kind: output, shape index: {1}]
  %8 = xla_tuple %s6, %s7
  %s9 = sld [smem:[#allocation0]]
  $region93: #{tpu_custom_call.1} parent=0
    _
  %s11 = ssub.s32 1, %s9
  %s12 = scalar_select 0, %s11, %s9
  $region1: #{tpu_custom_call.1} parent=0
    #allocation3 [shape = 'u8[16384]{0}', space=vmem, size = 0x4000, scoped, tag = 'input window, operand 0']
    #allocation4 [shape = 's32[2]{0}', space=sflag, size = 0x8, scoped, tag = 'scoped memory for tpu_custom_call.1']
    #allocation5 [shape = 's32[2]{0}', space=sflag, size = 0x8, scoped, tag = 'scoped memory for tpu_custom_call.1']
    #allocation6 [shape = 'u8[8192]{0}', space=vmem, size = 0x2000, scoped, tag = 'input window, operand 1']
    #allocation7 [shape = 's32[2]{0}', space=sflag, size = 0x8, scoped, tag = 'scoped memory for tpu_custom_call.1']
    #allocation8 [shape = 'u8[1048576]{0}', space=vmem, size = 0x100000, scoped, tag = 'input window, operand 2']
    #allocation9 [shape = 'u8[4096]{0}', space=vmem, size = 0x1000, scoped, tag = 'input window, operand 3, single buffered']
    #allocation10 [shape = 's32[1]{0}', space=sflag, size = 0x4, scoped, tag = 'scoped memory for tpu_custom_call.1']
    #allocation11 [shape = 'u8[512]{0}', space=vmem, size = 0x400, scoped, tag = 'input window, operand 5, single buffered']
    #allocation12 [shape = 'u8[8192]{0}', space=vmem, size = 0x2000, scoped, tag = 'output window, operand 0']
    #allocation13 [shape = 'u8[8192]{0}', space=vmem, size = 0x2000, scoped, tag = 'output window, operand 1']
    #allocation14 [shape = 's32[2]{0}', space=sflag, size = 0x8, scoped, tag = 'scoped memory for tpu_custom_call.1']
    %13 = vsyncpa [#allocation4], 0
    %s14 = scalar_lea.sflag [#allocation4], 1
    %15 = vsyncpa %s14, 0
    %16 = vsyncpa [#allocation7], 0
    %s17 = scalar_lea.sflag [#allocation7], 1
    %18 = vsyncpa %s17, 0
    %19 = vsyncpa [#allocation10], 0
    %20 = vsyncpa [#allocation5], 0
    %s21 = scalar_lea.sflag [#allocation5], 1
    %22 = vsyncpa %s21, 0
    %23 = vsyncpa [#allocation14], 0
    %s24 = scalar_lea.sflag [#allocation14], 1
    %25 = vsyncpa %s24, 0
    loop: start=0, step=1, limit=10
    $region2: #{tpu_custom_call.1} parent=1 // loop_pre_header
      _
    $region3: #{tpu_custom_call.1} parent=1 // loop_header
      %s27 = sphi 0, %s31
      %p28 = scmp.ge.s32.totalorder %s27, 10
      %s34 = sphi 0, %s46
      %s35 = sphi 0, %s42
      %s36 = sphi 0, %s34
      %s37 = sphi 0, %s35
      %s38 = sphi 0, %s36
      %s39 = sphi 0, %s37
      %s51 = sphi 0, %s53
      %s54 = sphi 0, %s51
      %s55 = sphi 0, %s54
      %s71 = sphi 0, %s55
      %s77 = sphi 0, %s79
      %s80 = sphi 0, %s77
      %s81 = sphi 0, %s80
      %s97 = sphi 0, %s81
      %s103 = sphi 0, %s105
      %s106 = sphi 0, %s103
      %s107 = sphi 0, %s106
      %s123 = sphi 0, %s107
      %s127 = sphi 0, %s127
      %s129 = sphi 0, %s127
      %s130 = sphi 0, %s129
      %s144 = sphi 0, %s130
      %s148 = sphi 0, %s148
      %s150 = sphi 0, %s148
      %s151 = sphi 0, %s150
      %s165 = sphi 0, %s151
      %s169 = sphi 0, %s169
      %s171 = sphi 0, %s169
      %s172 = sphi 0, %s171
      %s186 = sphi 0, %s172
      %s192 = sphi 0, %s194
      %s195 = sphi 0, %s192
      %s196 = sphi 0, %s195
      %s212 = sphi 0, %s196
      %s218 = sphi 0, %s220
      %s221 = sphi 0, %s218
      %s222 = sphi 0, %s221
      %s238 = sphi 0, %s222
    $region4: #{tpu_custom_call.1} parent=1 // loop_header_branch
      %30 = sbr.rel (%p28) target = $region8
    $region5: #{tpu_custom_call.1} parent=1 // loop_body
      %s32 = ssub.s32 %s27, 1
      %s33 = ssub.s32 %s27, 2
      %s40 = sadd.s32 1, %s35
      %p41 = scmp.ge.s32.totalorder %s40, 4
      %s42 = scalar_select %p41, 0, %s40
      %s43 = sadd.s32 1, %s34
      %s44 = scalar_select %p41, %s43, %s34
      %p45 = scmp.ge.s32.totalorder %s44, 2
      %s46 = scalar_select %p45, 0, %s44
      %s47 = ssub.s32 %s34, %s46
      %s48 = ssub.s32 %s35, %s42
      %s49 = sor.u32 %s47, %s48
      %p50 = scmp.eq.s32.totalorder %s49, 0
      %s52 = sadd.s32 %s51, 1
      %s53 = scalar_select %p50, %s51, %s52
      %p56 = pneg %p50
      %p57 = scmp.eq.s32.totalorder %s27, 7
      %p58 = por %p56, %p57
      %p59 = scmp.ne.s32.totalorder %s51, %s54
      %p60 = scmp.eq.s32.totalorder %s27, 0
      %p61 = por %p59, %p60
      %p62 = scmp.ne.s32.totalorder %s51, %s54
      %p63 = scmp.eq.s32.totalorder %s32, 7
      %p64 = por %p62, %p63
      %p65 = scmp.ne.s32.totalorder %s54, %s55
      %p66 = scmp.eq.s32.totalorder %s32, 0
      %p67 = por %p65, %p66
      %p68 = scmp.ne.s32.totalorder %s54, %s55
      %p69 = scmp.eq.s32.totalorder %s33, 7
      %p70 = por %p68, %p69
      %p72 = scmp.ne.s32.totalorder %s55, %s71
      %p73 = scmp.eq.s32.totalorder %s33, 0
      %p74 = por %p72, %p73
      %s75 = ssub.s32 %s34, %s46
      %p76 = scmp.eq.s32.totalorder %s75, 0
      %s78 = sadd.s32 %s77, 1
      %s79 = scalar_select %p76, %s77, %s78
      %p82 = pneg %p76
      %p83 = scmp.eq.s32.totalorder %s27, 7
      %p84 = por %p82, %p83
      %p85 = scmp.ne.s32.totalorder %s77, %s80
      %p86 = scmp.eq.s32.totalorder %s27, 0
      %p87 = por %p85, %p86
      %p88 = scmp.ne.s32.totalorder %s77, %s80
      %p89 = scmp.eq.s32.totalorder %s32, 7
      %p90 = por %p88, %p89
      %p91 = scmp.ne.s32.totalorder %s80, %s81
      %p92 = scmp.eq.s32.totalorder %s32, 0
      %p93 = por %p91, %p92
      %p94 = scmp.ne.s32.totalorder %s80, %s81
      %p95 = scmp.eq.s32.totalorder %s33, 7
      %p96 = por %p94, %p95
      %p98 = scmp.ne.s32.totalorder %s81, %s97
      %p99 = scmp.eq.s32.totalorder %s33, 0
      %p100 = por %p98, %p99
      %s101 = ssub.s32 %s35, %s42
      %p102 = scmp.eq.s32.totalorder %s101, 0
      %s104 = sadd.s32 %s103, 1
      %s105 = scalar_select %p102, %s103, %s104
      %p108 = pneg %p102
      %p109 = scmp.eq.s32.totalorder %s27, 7
      %p110 = por %p108, %p109
      %p111 = scmp.ne.s32.totalorder %s103, %s106
      %p112 = scmp.eq.s32.totalorder %s27, 0
      %p113 = por %p111, %p112
      %p114 = scmp.ne.s32.totalorder %s103, %s106
      %p115 = scmp.eq.s32.totalorder %s32, 7
      %p116 = por %p114, %p115
      %p117 = scmp.ne.s32.totalorder %s106, %s107
      %p118 = scmp.eq.s32.totalorder %s32, 0
      %p119 = por %p117, %p118
      %p120 = scmp.ne.s32.totalorder %s106, %s107
      %p121 = scmp.eq.s32.totalorder %s33, 7
      %p122 = por %p120, %p121
      %p124 = scmp.ne.s32.totalorder %s107, %s123
      %p125 = scmp.eq.s32.totalorder %s33, 0
      %p126 = por %p124, %p125
      %s128 = sadd.s32 %s127, 1
      %p131 = scmp.eq.s32.totalorder %s27, 7
      %p132 = scmp.ne.s32.totalorder %s127, %s129
      %p133 = scmp.eq.s32.totalorder %s27, 0
      %p134 = por %p132, %p133
      %p135 = scmp.ne.s32.totalorder %s127, %s129
      %p136 = scmp.eq.s32.totalorder %s32, 7
      %p137 = por %p135, %p136
      %p138 = scmp.ne.s32.totalorder %s129, %s130
      %p139 = scmp.eq.s32.totalorder %s32, 0
      %p140 = por %p138, %p139
      %p141 = scmp.ne.s32.totalorder %s129, %s130
      %p142 = scmp.eq.s32.totalorder %s33, 7
      %p143 = por %p141, %p142
      %p145 = scmp.ne.s32.totalorder %s130, %s144
      %p146 = scmp.eq.s32.totalorder %s33, 0
      %p147 = por %p145, %p146
      %s149 = sadd.s32 %s148, 1
      %p152 = scmp.eq.s32.totalorder %s27, 7
      %p153 = scmp.ne.s32.totalorder %s148, %s150
      %p154 = scmp.eq.s32.totalorder %s27, 0
      %p155 = por %p153, %p154
      %p156 = scmp.ne.s32.totalorder %s148, %s150
      %p157 = scmp.eq.s32.totalorder %s32, 7
      %p158 = por %p156, %p157
      %p159 = scmp.ne.s32.totalorder %s150, %s151
      %p160 = scmp.eq.s32.totalorder %s32, 0
      %p161 = por %p159, %p160
      %p162 = scmp.ne.s32.totalorder %s150, %s151
      %p163 = scmp.eq.s32.totalorder %s33, 7
      %p164 = por %p162, %p163
      %p166 = scmp.ne.s32.totalorder %s151, %s165
      %p167 = scmp.eq.s32.totalorder %s33, 0
      %p168 = por %p166, %p167
      %s170 = sadd.s32 %s169, 1
      %p173 = scmp.eq.s32.totalorder %s27, 7
      %p174 = scmp.ne.s32.totalorder %s169, %s171
      %p175 = scmp.eq.s32.totalorder %s27, 0
      %p176 = por %p174, %p175
      %p177 = scmp.ne.s32.totalorder %s169, %s171
      %p178 = scmp.eq.s32.totalorder %s32, 7
      %p179 = por %p177, %p178
      %p180 = scmp.ne.s32.totalorder %s171, %s172
      %p181 = scmp.eq.s32.totalorder %s32, 0
      %p182 = por %p180, %p181
      %p183 = scmp.ne.s32.totalorder %s171, %s172
      %p184 = scmp.eq.s32.totalorder %s33, 7
      %p185 = por %p183, %p184
      %p187 = scmp.ne.s32.totalorder %s172, %s186
      %p188 = scmp.eq.s32.totalorder %s33, 0
      %p189 = por %p187, %p188
      %s190 = ssub.s32 %s34, %s46
      %p191 = scmp.eq.s32.totalorder %s190, 0
      %s193 = sadd.s32 %s192, 1
      %s194 = scalar_select %p191, %s192, %s193
      %p197 = pneg %p191
      %p198 = scmp.eq.s32.totalorder %s27, 7
      %p199 = por %p197, %p198
      %p200 = scmp.ne.s32.totalorder %s192, %s195
      %p201 = scmp.eq.s32.totalorder %s27, 0
      %p202 = por %p200, %p201
      %p203 = scmp.ne.s32.totalorder %s192, %s195
      %p204 = scmp.eq.s32.totalorder %s32, 7
      %p205 = por %p203, %p204
      %p206 = scmp.ne.s32.totalorder %s195, %s196
      %p207 = scmp.eq.s32.totalorder %s32, 0
      %p208 = por %p206, %p207
      %p209 = scmp.ne.s32.totalorder %s195, %s196
      %p210 = scmp.eq.s32.totalorder %s33, 7
      %p211 = por %p209, %p210
      %p213 = scmp.ne.s32.totalorder %s196, %s212
      %p214 = scmp.eq.s32.totalorder %s33, 0
      %p215 = por %p213, %p214
      %s216 = ssub.s32 %s34, %s46
      %p217 = scmp.eq.s32.totalorder %s216, 0
      %s219 = sadd.s32 %s218, 1
      %s220 = scalar_select %p217, %s218, %s219
      %p223 = pneg %p217
      %p224 = scmp.eq.s32.totalorder %s27, 7
      %p225 = por %p223, %p224
      %p226 = scmp.ne.s32.totalorder %s218, %s221
      %p227 = scmp.eq.s32.totalorder %s27, 0
      %p228 = por %p226, %p227
      %p229 = scmp.ne.s32.totalorder %s218, %s221
      %p230 = scmp.eq.s32.totalorder %s32, 7
      %p231 = por %p229, %p230
      %p232 = scmp.ne.s32.totalorder %s221, %s222
      %p233 = scmp.eq.s32.totalorder %s32, 0
      %p234 = por %p232, %p233
      %p235 = scmp.ne.s32.totalorder %s221, %s222
      %p236 = scmp.eq.s32.totalorder %s33, 7
      %p237 = por %p235, %p236
      %p239 = scmp.ne.s32.totalorder %s222, %s238
      %p240 = scmp.eq.s32.totalorder %s33, 0
      %p241 = por %p239, %p240
      %p242 = scmp.le.s32.totalorder 1, %s27
      %p243 = scmp.lt.s32.totalorder %s27, 9
      %p244 = pnand %p242, %p243
      %p245 = pneg %p244
      // Predicated region
      $region9: #{tpu_custom_call.1} parent=5 // pred_check
        _
      $region10: #{tpu_custom_call.1} parent=5 // pred_check_branch
        %247 = sbr.rel (%p244) target = $region12
      $region11: #{tpu_custom_call.1} parent=5 // pred_region
        %s248 = ssub.s32 %s27, 1
        // Predicated region
        $region13: #{tpu_custom_call.1} parent=11 // pred_check
          %p249 = pneg %p140
        $region14: #{tpu_custom_call.1} parent=11 // pred_check_branch
          %251 = sbr.rel (%p249) target = $region16
        $region15: #{tpu_custom_call.1} parent=11 // pred_region
          %253 = vsyncadd [#allocation10], 0
          %s255 = sshll.u32 %s3, 4
          %s256 = int_to_ptr.hbm [resolvable:$true] %s255
          %s257 = sshll.u32 [#allocation9], 4
          %s258 = int_to_ptr.vmem [resolvable:$true] %s257
          %260 = dma.hbm_to_vmem [thread:$0]  %s256, 128, %s258, [#allocation10]
        $region16: #{tpu_custom_call.1} parent=11 // pred_fallthru
          _
        // Predicated region
        $region17: #{tpu_custom_call.1} parent=11 // pred_check
          %p261 = pneg %p161
        $region18: #{tpu_custom_call.1} parent=11 // pred_check_branch
          %263 = sbr.rel (%p261) target = $region20
        $region19: #{tpu_custom_call.1} parent=11 // pred_region
          _
        $region20: #{tpu_custom_call.1} parent=11 // pred_fallthru
          _
        // Predicated region
        $region21: #{tpu_custom_call.1} parent=11 // pred_check
          %p264 = pneg %p182
        $region22: #{tpu_custom_call.1} parent=11 // pred_check_branch
          %266 = sbr.rel (%p264) target = $region24
        $region23: #{tpu_custom_call.1} parent=11 // pred_region
          %268 = vsyncadd [#allocation10], 0
          %s270 = sshll.u32 %s5, 4
          %s271 = int_to_ptr.hbm [resolvable:$true] %s270
          %s272 = sshll.u32 [#allocation11], 4
          %s273 = int_to_ptr.vmem [resolvable:$true] %s272
          %275 = dma.hbm_to_vmem [thread:$0]  %s271, 16, %s273, [#allocation10]
        $region24: #{tpu_custom_call.1} parent=11 // pred_fallthru
          _
      $region12: #{tpu_custom_call.1} parent=5 // pred_fallthru
        _
      %p276 = scmp.lt.s32.totalorder %s27, 8
      // Predicated region
      $region25: #{tpu_custom_call.1} parent=5 // pred_check
        %p277 = pneg %p276
      $region26: #{tpu_custom_call.1} parent=5 // pred_check_branch
        %279 = sbr.rel (%p277) target = $region28
      $region27: #{tpu_custom_call.1} parent=5 // pred_region
        // Predicated region
        $region29: #{tpu_custom_call.1} parent=27 // pred_check
          %p280 = pneg %p61
        $region30: #{tpu_custom_call.1} parent=27 // pred_check_branch
          %282 = sbr.rel (%p280) target = $region32
        $region31: #{tpu_custom_call.1} parent=27 // pred_region
          %s283 = sand.u32 %s51, 1
          %s284 = scalar_lea.sflag [#allocation4], %s283
          %s285 = sand.u32 %s51, 1
          %s286 = smul.addr %s285, 16
          %s287 = scalar_lea.vmem [#allocation3], %s286
          %s288 = smul.u32 2, %s35
          %290 = vsyncadd %s284, 0
          %s291 = smul.addr %s34, 8
          %s292 = sadd.s32 %s288, %s291
          %s293 = smul.addr %s292, 8
          %s294 = scalar_lea.hbm %s0, %s293
          %s296 = sshll.u32 %s294, 4
          %s297 = int_to_ptr.hbm [resolvable:$true] %s296
          %s298 = sshll.u32 %s287, 4
          %s299 = int_to_ptr.vmem [resolvable:$true] %s298
          %301 = dma.hbm_to_vmem [thread:$0]  %s297, 256, %s299, %s284
        $region32: #{tpu_custom_call.1} parent=27 // pred_fallthru
          _
        // Predicated region
        $region33: #{tpu_custom_call.1} parent=27 // pred_check
          %p302 = pneg %p87
        $region34: #{tpu_custom_call.1} parent=27 // pred_check_branch
          %304 = sbr.rel (%p302) target = $region36
        $region35: #{tpu_custom_call.1} parent=27 // pred_region
          %s305 = sand.u32 %s27, 1
          %s306 = scalar_lea.sflag [#allocation7], %s305
          %s307 = sand.u32 %s77, 1
          %s308 = smul.addr %s307, 8
          %s309 = scalar_lea.vmem [#allocation6], %s308
          %311 = vsyncadd %s306, 0
          %s312 = smul.addr %s34, 8
          %s313 = scalar_lea.hbm %s1, %s312
          %s315 = sshll.u32 %s313, 4
          %s316 = int_to_ptr.hbm [resolvable:$true] %s315
          %s317 = sshll.u32 %s309, 4
          %s318 = int_to_ptr.vmem [resolvable:$true] %s317
          %320 = dma.hbm_to_vmem [thread:$0]  %s316, 128, %s318, %s306
        $region36: #{tpu_custom_call.1} parent=27 // pred_fallthru
          _
        // Predicated region
        $region37: #{tpu_custom_call.1} parent=27 // pred_check
          %p321 = pneg %p113
        $region38: #{tpu_custom_call.1} parent=27 // pred_check_branch
          %323 = sbr.rel (%p321) target = $region40
        $region39: #{tpu_custom_call.1} parent=27 // pred_region
          %s324 = sand.u32 %s27, 1
          %s325 = scalar_lea.sflag [#allocation7], %s324
          %s326 = sand.u32 %s103, 1
          %s327 = smul.addr %s326, 1024
          %s328 = scalar_lea.vmem [#allocation8], %s327
          %s329 = smul.u32 32, %s35
          %331 = vsyncadd %s325, 0
          %s332 = smul.addr %s329, 8
          %s333 = smul.addr %s332, 4
          %s334 = scalar_lea.hbm %s2, %s333
          %s335 = sshll.u32 %s334, 4
          %s336 = int_to_ptr.hbm [resolvable:$true] %s335
          %s337 = sshll.u32 %s328, 4
          %s338 = int_to_ptr.vmem [resolvable:$true] %s337
          %343 = dma.hbm_to_vmem [thread:$0]  %s336, 16384, %s338, %s325, 512, 512, 32
        $region40: #{tpu_custom_call.1} parent=27 // pred_fallthru
          _
      $region28: #{tpu_custom_call.1} parent=5 // pred_fallthru
        _
      %p344 = scmp.le.s32.totalorder 1, %s27
      %p345 = scmp.lt.s32.totalorder %s27, 9
      %p346 = pnand %p344, %p345
      %p347 = pneg %p346
      // Predicated region
      $region41: #{tpu_custom_call.1} parent=5 // pred_check
        _
      $region42: #{tpu_custom_call.1} parent=5 // pred_check_branch
        %349 = sbr.rel (%p346) target = $region44
      $region43: #{tpu_custom_call.1} parent=5 // pred_region
        %s350 = ssub.s32 %s27, 1
        %s351 = sand.u32 %s54, 1
        %s352 = scalar_lea.sflag [#allocation4], %s351
        %s353 = sand.u32 %s54, 1
        %s354 = smul.addr %s353, 16
        %s355 = scalar_lea.vmem [#allocation3], %s354
        // Predicated region
        $region45: #{tpu_custom_call.1} parent=43 // pred_check
          %p356 = pneg %p67
        $region46: #{tpu_custom_call.1} parent=43 // pred_check_branch
          %358 = sbr.rel (%p356) target = $region48
        $region47: #{tpu_custom_call.1} parent=43 // pred_region
          %360 = dma.done %s352, 256
        $region48: #{tpu_custom_call.1} parent=43 // pred_fallthru
          _
        %s361 = sand.u32 %s32, 1
        %s362 = scalar_lea.sflag [#allocation7], %s361
        %s363 = sand.u32 %s80, 1
        %s364 = smul.addr %s363, 8
        %s365 = scalar_lea.vmem [#allocation6], %s364
        // Predicated region
        $region49: #{tpu_custom_call.1} parent=43 // pred_check
          %p366 = pneg %p93
        $region50: #{tpu_custom_call.1} parent=43 // pred_check_branch
          %368 = sbr.rel (%p366) target = $region52
        $region51: #{tpu_custom_call.1} parent=43 // pred_region
          %370 = dma.done %s362, 128
        $region52: #{tpu_custom_call.1} parent=43 // pred_fallthru
          _
        %s371 = sand.u32 %s32, 1
        %s372 = scalar_lea.sflag [#allocation7], %s371
        %s373 = sand.u32 %s106, 1
        %s374 = smul.addr %s373, 1024
        %s375 = scalar_lea.vmem [#allocation8], %s374
        // Predicated region
        $region53: #{tpu_custom_call.1} parent=43 // pred_check
          %p376 = pneg %p119
        $region54: #{tpu_custom_call.1} parent=43 // pred_check_branch
          %378 = sbr.rel (%p376) target = $region56
        $region55: #{tpu_custom_call.1} parent=43 // pred_region
          %380 = dma.done %s372, 16384
        $region56: #{tpu_custom_call.1} parent=43 // pred_fallthru
          _
        // Predicated region
        $region57: #{tpu_custom_call.1} parent=43 // pred_check
          %p381 = pneg %p140
        $region58: #{tpu_custom_call.1} parent=43 // pred_check_branch
          %383 = sbr.rel (%p381) target = $region60
        $region59: #{tpu_custom_call.1} parent=43 // pred_region
          %385 = dma.done [#allocation10], 128
        $region60: #{tpu_custom_call.1} parent=43 // pred_fallthru
          _
        // Predicated region
        $region61: #{tpu_custom_call.1} parent=43 // pred_check
          %p386 = pneg %p182
        $region62: #{tpu_custom_call.1} parent=43 // pred_check_branch
          %388 = sbr.rel (%p386) target = $region64
        $region63: #{tpu_custom_call.1} parent=43 // pred_region
          %390 = dma.done [#allocation10], 16
        $region64: #{tpu_custom_call.1} parent=43 // pred_fallthru
          _
        %s391 = sand.u32 %s54, 1
        %s392 = scalar_lea.sflag [#allocation4], %s391
        %s393 = sand.u32 %s54, 1
        %s394 = smul.addr %s393, 16
        %s395 = scalar_lea.vmem [#allocation3], %s394
        %p396 = pneg %p67
        %p397 = pneg %p64
        %s398 = sand.u32 %s32, 1
        %s399 = scalar_lea.sflag [#allocation7], %s398
        %s400 = sand.u32 %s80, 1
        %s401 = smul.addr %s400, 8
        %s402 = scalar_lea.vmem [#allocation6], %s401
        %p403 = pneg %p93
        %p404 = pneg %p90
        %s405 = sand.u32 %s32, 1
        %s406 = scalar_lea.sflag [#allocation7], %s405
        %s407 = sand.u32 %s106, 1
        %s408 = smul.addr %s407, 1024
        %s409 = scalar_lea.vmem [#allocation8], %s408
        %p410 = pneg %p119
        %p411 = pneg %p116
        %p412 = pneg %p140
        %p413 = pneg %p137
        %p414 = pneg %p161
        %p415 = pneg %p158
        %p416 = pneg %p182
        %p417 = pneg %p179
        %p418 = pneg %p208
        %p419 = pneg %p205
        %s420 = sand.u32 %s195, 1
        %s421 = scalar_lea.sflag [#allocation5], %s420
        %s422 = sand.u32 %s195, 1
        %s423 = smul.addr %s422, 8
        %s424 = scalar_lea.vmem [#allocation12], %s423
        %p425 = pneg %p234
        %p426 = pneg %p231
        %s427 = sand.u32 %s221, 1
        %s428 = scalar_lea.sflag [#allocation14], %s427
        %s429 = sand.u32 %s221, 1
        %s430 = smul.addr %s429, 8
        %s431 = scalar_lea.vmem [#allocation13], %s430
        %s432 = smul.u32 2, %s37
        %s433 = smul.u32 32, %s37
        %p434 = scmp.eq.s32.totalorder %s37, 0
        // Predicated region
        $region65: #{tpu_custom_call.1} parent=43 // pred_check
          %p435 = pneg %p434
        $region66: #{tpu_custom_call.1} parent=43 // pred_check_branch
          %437 = sbr.rel (%p435) target = $region68
        $region67: #{tpu_custom_call.1} parent=43 // pred_region
          %438 = vst [vmem:[#allocation2] sm:$0xff] 0.0
          %439 = vst [vmem:[#allocation2 + $0x8] sm:$0xff] 0.0
          %440 = vst [vmem:[#allocation2 + $0x10] sm:$0xff] 0.0
          %441 = vst [vmem:[#allocation2 + $0x18] sm:$0xff] 0.0
          %442 = vst [vmem:[#allocation2 + $0x20] sm:$0xff] 0.0
          %443 = vst [vmem:[#allocation2 + $0x28] sm:$0xff] 0.0
          %444 = vst [vmem:[#allocation2 + $0x30] sm:$0xff] 0.0
          %445 = vst [vmem:[#allocation2 + $0x38] sm:$0xff] 0.0
        $region68: #{tpu_custom_call.1} parent=43 // pred_fallthru
          _
        %v446 = vld [vmem:[%s355] sm:$0xff]
        %v447 = vld [vmem:[%s355 + $0x8] sm:$0xff]
        %v448 = vpack.c.bf16 %v446, %v446
        %v449 = vpack.c.bf16 %v447, %v447
        %v450 = vld [vmem:[#allocation2] sm:$0xff]
        %v451 = vld [vmem:[#allocation2 + $0x8] sm:$0xff]
        %v452 = vld [vmem:[#allocation2 + $0x10] sm:$0xff]
        %v453 = vld [vmem:[#allocation2 + $0x18] sm:$0xff]
        %v454 = vld [vmem:[#allocation2 + $0x20] sm:$0xff]
        %v455 = vld [vmem:[#allocation2 + $0x28] sm:$0xff]
        %v456 = vld [vmem:[#allocation2 + $0x30] sm:$0xff]
        %v457 = vld [vmem:[#allocation2 + $0x38] sm:$0xff]
        %v458 = vld [vmem:[%s375] sm:$0xff]
        %v459 = vld [vmem:[%s375 + $0x8] sm:$0xff]
        %v460 = vld [vmem:[%s375 + $0x10] sm:$0xff]
        %v461 = vld [vmem:[%s375 + $0x18] sm:$0xff]
        %v462 = vld [vmem:[%s375 + $0x20] sm:$0xff]
        %v463 = vld [vmem:[%s375 + $0x28] sm:$0xff]
        %v464 = vld [vmem:[%s375 + $0x30] sm:$0xff]
        %v465 = vld [vmem:[%s375 + $0x38] sm:$0xff]
        %v466 = vld [vmem:[%s375 + $0x40] sm:$0xff]
        %v467 = vld [vmem:[%s375 + $0x48] sm:$0xff]
        %v468 = vld [vmem:[%s375 + $0x50] sm:$0xff]
        %v469 = vld [vmem:[%s375 + $0x58] sm:$0xff]
        %v470 = vld [vmem:[%s375 + $0x60] sm:$0xff]
        %v471 = vld [vmem:[%s375 + $0x68] sm:$0xff]
        %v472 = vld [vmem:[%s375 + $0x70] sm:$0xff]
        %v473 = vld [vmem:[%s375 + $0x78] sm:$0xff]
        %v474 = vld [vmem:[%s375 + $0x80] sm:$0xff]
        %v475 = vld [vmem:[%s375 + $0x88] sm:$0xff]
        %v476 = vld [vmem:[%s375 + $0x90] sm:$0xff]
        %v477 = vld [vmem:[%s375 + $0x98] sm:$0xff]
        %v478 = vld [vmem:[%s375 + $0xa0] sm:$0xff]
        %v479 = vld [vmem:[%s375 + $0xa8] sm:$0xff]
        %v480 = vld [vmem:[%s375 + $0xb0] sm:$0xff]
        %v481 = vld [vmem:[%s375 + $0xb8] sm:$0xff]
        %v482 = vld [vmem:[%s375 + $0xc0] sm:$0xff]
        %v483 = vld [vmem:[%s375 + $0xc8] sm:$0xff]
        %v484 = vld [vmem:[%s375 + $0xd0] sm:$0xff]
        %v485 = vld [vmem:[%s375 + $0xd8] sm:$0xff]
        %v486 = vld [vmem:[%s375 + $0xe0] sm:$0xff]
        %v487 = vld [vmem:[%s375 + $0xe8] sm:$0xff]
        %v488 = vld [vmem:[%s375 + $0xf0] sm:$0xff]
        %v489 = vld [vmem:[%s375 + $0xf8] sm:$0xff]
        %v490 = vld [vmem:[%s375 + $0x100] sm:$0xff]
        %v491 = vld [vmem:[%s375 + $0x108] sm:$0xff]
        %v492 = vld [vmem:[%s375 + $0x110] sm:$0xff]
        %v493 = vld [vmem:[%s375 + $0x118] sm:$0xff]
        %v494 = vld [vmem:[%s375 + $0x120] sm:$0xff]
        %v495 = vld [vmem:[%s375 + $0x128] sm:$0xff]
        %v496 = vld [vmem:[%s375 + $0x130] sm:$0xff]
        %v497 = vld [vmem:[%s375 + $0x138] sm:$0xff]
        %v498 = vld [vmem:[%s375 + $0x140] sm:$0xff]
        %v499 = vld [vmem:[%s375 + $0x148] sm:$0xff]
        %v500 = vld [vmem:[%s375 + $0x150] sm:$0xff]
        %v501 = vld [vmem:[%s375 + $0x158] sm:$0xff]
        %v502 = vld [vmem:[%s375 + $0x160] sm:$0xff]
        %v503 = vld [vmem:[%s375 + $0x168] sm:$0xff]
        %v504 = vld [vmem:[%s375 + $0x170] sm:$0xff]
        %v505 = vld [vmem:[%s375 + $0x178] sm:$0xff]
        %v506 = vld [vmem:[%s375 + $0x180] sm:$0xff]
        %v507 = vld [vmem:[%s375 + $0x188] sm:$0xff]
        %v508 = vld [vmem:[%s375 + $0x190] sm:$0xff]
        %v509 = vld [vmem:[%s375 + $0x198] sm:$0xff]
        %v510 = vld [vmem:[%s375 + $0x1a0] sm:$0xff]
        %v511 = vld [vmem:[%s375 + $0x1a8] sm:$0xff]
        %v512 = vld [vmem:[%s375 + $0x1b0] sm:$0xff]
        %v513 = vld [vmem:[%s375 + $0x1b8] sm:$0xff]
        %v514 = vld [vmem:[%s375 + $0x1c0] sm:$0xff]
        %v515 = vld [vmem:[%s375 + $0x1c8] sm:$0xff]
        %v516 = vld [vmem:[%s375 + $0x1d0] sm:$0xff]
        %v517 = vld [vmem:[%s375 + $0x1d8] sm:$0xff]
        %v518 = vld [vmem:[%s375 + $0x1e0] sm:$0xff]
        %v519 = vld [vmem:[%s375 + $0x1e8] sm:$0xff]
        %v520 = vld [vmem:[%s375 + $0x1f0] sm:$0xff]
        %v521 = vld [vmem:[%s375 + $0x1f8] sm:$0xff]
        %v522 = vld [vmem:[%s375 + $0x200] sm:$0xff]
        %v523 = vld [vmem:[%s375 + $0x208] sm:$0xff]
        %v524 = vld [vmem:[%s375 + $0x210] sm:$0xff]
        %v525 = vld [vmem:[%s375 + $0x218] sm:$0xff]
        %v526 = vld [vmem:[%s375 + $0x220] sm:$0xff]
        %v527 = vld [vmem:[%s375 + $0x228] sm:$0xff]
        %v528 = vld [vmem:[%s375 + $0x230] sm:$0xff]
        %v529 = vld [vmem:[%s375 + $0x238] sm:$0xff]
        %v530 = vld [vmem:[%s375 + $0x240] sm:$0xff]
        %v531 = vld [vmem:[%s375 + $0x248] sm:$0xff]
        %v532 = vld [vmem:[%s375 + $0x250] sm:$0xff]
        %v533 = vld [vmem:[%s375 + $0x258] sm:$0xff]
        %v534 = vld [vmem:[%s375 + $0x260] sm:$0xff]
        %v535 = vld [vmem:[%s375 + $0x268] sm:$0xff]
        %v536 = vld [vmem:[%s375 + $0x270] sm:$0xff]
        %v537 = vld [vmem:[%s375 + $0x278] sm:$0xff]
        %v538 = vld [vmem:[%s375 + $0x280] sm:$0xff]
        %v539 = vld [vmem:[%s375 + $0x288] sm:$0xff]
        %v540 = vld [vmem:[%s375 + $0x290] sm:$0xff]
        %v541 = vld [vmem:[%s375 + $0x298] sm:$0xff]
        %v542 = vld [vmem:[%s375 + $0x2a0] sm:$0xff]
        %v543 = vld [vmem:[%s375 + $0x2a8] sm:$0xff]
        %v544 = vld [vmem:[%s375 + $0x2b0] sm:$0xff]
        %v545 = vld [vmem:[%s375 + $0x2b8] sm:$0xff]
        %v546 = vld [vmem:[%s375 + $0x2c0] sm:$0xff]
        %v547 = vld [vmem:[%s375 + $0x2c8] sm:$0xff]
        %v548 = vld [vmem:[%s375 + $0x2d0] sm:$0xff]
        %v549 = vld [vmem:[%s375 + $0x2d8] sm:$0xff]
        %v550 = vld [vmem:[%s375 + $0x2e0] sm:$0xff]
        %v551 = vld [vmem:[%s375 + $0x2e8] sm:$0xff]
        %v552 = vld [vmem:[%s375 + $0x2f0] sm:$0xff]
        %v553 = vld [vmem:[%s375 + $0x2f8] sm:$0xff]
        %v554 = vld [vmem:[%s375 + $0x300] sm:$0xff]
        %v555 = vld [vmem:[%s375 + $0x308] sm:$0xff]
        %v556 = vld [vmem:[%s375 + $0x310] sm:$0xff]
        %v557 = vld [vmem:[%s375 + $0x318] sm:$0xff]
        %v558 = vld [vmem:[%s375 + $0x320] sm:$0xff]
        %v559 = vld [vmem:[%s375 + $0x328] sm:$0xff]
        %v560 = vld [vmem:[%s375 + $0x330] sm:$0xff]
        %v561 = vld [vmem:[%s375 + $0x338] sm:$0xff]
        %v562 = vld [vmem:[%s375 + $0x340] sm:$0xff]
        %v563 = vld [vmem:[%s375 + $0x348] sm:$0xff]
        %v564 = vld [vmem:[%s375 + $0x350] sm:$0xff]
        %v565 = vld [vmem:[%s375 + $0x358] sm:$0xff]
        %v566 = vld [vmem:[%s375 + $0x360] sm:$0xff]
        %v567 = vld [vmem:[%s375 + $0x368] sm:$0xff]
        %v568 = vld [vmem:[%s375 + $0x370] sm:$0xff]
        %v569 = vld [vmem:[%s375 + $0x378] sm:$0xff]
        %v570 = vld [vmem:[%s375 + $0x380] sm:$0xff]
        %v571 = vld [vmem:[%s375 + $0x388] sm:$0xff]
        %v572 = vld [vmem:[%s375 + $0x390] sm:$0xff]
        %v573 = vld [vmem:[%s375 + $0x398] sm:$0xff]
        %v574 = vld [vmem:[%s375 + $0x3a0] sm:$0xff]
        %v575 = vld [vmem:[%s375 + $0x3a8] sm:$0xff]
        %v576 = vld [vmem:[%s375 + $0x3b0] sm:$0xff]
        %v577 = vld [vmem:[%s375 + $0x3b8] sm:$0xff]
        %v578 = vld [vmem:[%s375 + $0x3c0] sm:$0xff]
        %v579 = vld [vmem:[%s375 + $0x3c8] sm:$0xff]
        %v580 = vld [vmem:[%s375 + $0x3d0] sm:$0xff]
        %v581 = vld [vmem:[%s375 + $0x3d8] sm:$0xff]
        %v582 = vld [vmem:[%s375 + $0x3e0] sm:$0xff]
        %v583 = vld [vmem:[%s375 + $0x3e8] sm:$0xff]
        %v584 = vld [vmem:[%s375 + $0x3f0] sm:$0xff]
        %v585 = vld [vmem:[%s375 + $0x3f8] sm:$0xff]
        %v714 = vunpack.c.l.b16 %v458
        %v715 = vunpack.c.h.b16 %v458
        %v716 = vunpack.c.l.b16 %v459
        %v717 = vunpack.c.h.b16 %v459
        %v718 = vunpack.c.l.b16 %v460
        %v719 = vunpack.c.h.b16 %v460
        %v720 = vunpack.c.l.b16 %v461
        %v721 = vunpack.c.h.b16 %v461
        %v722 = vunpack.c.l.b16 %v462
        %v723 = vunpack.c.h.b16 %v462
        %v724 = vunpack.c.l.b16 %v463
        %v725 = vunpack.c.h.b16 %v463
        %v726 = vunpack.c.l.b16 %v464
        %v727 = vunpack.c.h.b16 %v464
        %v728 = vunpack.c.l.b16 %v465
        %v729 = vunpack.c.h.b16 %v465
        %v730 = vunpack.c.l.b16 %v466
        %v731 = vunpack.c.h.b16 %v466
        %v732 = vunpack.c.l.b16 %v467
        %v733 = vunpack.c.h.b16 %v467
        %v734 = vunpack.c.l.b16 %v468
        %v735 = vunpack.c.h.b16 %v468
        %v736 = vunpack.c.l.b16 %v469
        %v737 = vunpack.c.h.b16 %v469
        %v738 = vunpack.c.l.b16 %v470
        %v739 = vunpack.c.h.b16 %v470
        %v740 = vunpack.c.l.b16 %v471
        %v741 = vunpack.c.h.b16 %v471
        %v742 = vunpack.c.l.b16 %v472
        %v743 = vunpack.c.h.b16 %v472
        %v744 = vunpack.c.l.b16 %v473
        %v745 = vunpack.c.h.b16 %v473
        %v746 = vunpack.c.l.b16 %v474
        %v747 = vunpack.c.h.b16 %v474
        %v748 = vunpack.c.l.b16 %v475
        %v749 = vunpack.c.h.b16 %v475
        %v750 = vunpack.c.l.b16 %v476
        %v751 = vunpack.c.h.b16 %v476
        %v752 = vunpack.c.l.b16 %v477
        %v753 = vunpack.c.h.b16 %v477
        %v754 = vunpack.c.l.b16 %v478
        %v755 = vunpack.c.h.b16 %v478
        %v756 = vunpack.c.l.b16 %v479
        %v757 = vunpack.c.h.b16 %v479
        %v758 = vunpack.c.l.b16 %v480
        %v759 = vunpack.c.h.b16 %v480
        %v760 = vunpack.c.l.b16 %v481
        %v761 = vunpack.c.h.b16 %v481
        %v762 = vunpack.c.l.b16 %v482
        %v763 = vunpack.c.h.b16 %v482
        %v764 = vunpack.c.l.b16 %v483
        %v765 = vunpack.c.h.b16 %v483
        %v766 = vunpack.c.l.b16 %v484
        %v767 = vunpack.c.h.b16 %v484
        %v768 = vunpack.c.l.b16 %v485
        %v769 = vunpack.c.h.b16 %v485
        %v770 = vunpack.c.l.b16 %v486
        %v771 = vunpack.c.h.b16 %v486
        %v772 = vunpack.c.l.b16 %v487
        %v773 = vunpack.c.h.b16 %v487
        %v774 = vunpack.c.l.b16 %v488
        %v775 = vunpack.c.h.b16 %v488
        %v776 = vunpack.c.l.b16 %v489
        %v777 = vunpack.c.h.b16 %v489
        %v778 = vunpack.c.l.b16 %v490
        %v779 = vunpack.c.h.b16 %v490
        %v780 = vunpack.c.l.b16 %v491
        %v781 = vunpack.c.h.b16 %v491
        %v782 = vunpack.c.l.b16 %v492
        %v783 = vunpack.c.h.b16 %v492
        %v784 = vunpack.c.l.b16 %v493
        %v785 = vunpack.c.h.b16 %v493
        %v786 = vunpack.c.l.b16 %v494
        %v787 = vunpack.c.h.b16 %v494
        %v788 = vunpack.c.l.b16 %v495
        %v789 = vunpack.c.h.b16 %v495
        %v790 = vunpack.c.l.b16 %v496
        %v791 = vunpack.c.h.b16 %v496
        %v792 = vunpack.c.l.b16 %v497
        %v793 = vunpack.c.h.b16 %v497
        %v794 = vunpack.c.l.b16 %v498
        %v795 = vunpack.c.h.b16 %v498
        %v796 = vunpack.c.l.b16 %v499
        %v797 = vunpack.c.h.b16 %v499
        %v798 = vunpack.c.l.b16 %v500
        %v799 = vunpack.c.h.b16 %v500
        %v800 = vunpack.c.l.b16 %v501
        %v801 = vunpack.c.h.b16 %v501
        %v802 = vunpack.c.l.b16 %v502
        %v803 = vunpack.c.h.b16 %v502
        %v804 = vunpack.c.l.b16 %v503
        %v805 = vunpack.c.h.b16 %v503
        %v806 = vunpack.c.l.b16 %v504
        %v807 = vunpack.c.h.b16 %v504
        %v808 = vunpack.c.l.b16 %v505
        %v809 = vunpack.c.h.b16 %v505
        %v810 = vunpack.c.l.b16 %v506
        %v811 = vunpack.c.h.b16 %v506
        %v812 = vunpack.c.l.b16 %v507
        %v813 = vunpack.c.h.b16 %v507
        %v814 = vunpack.c.l.b16 %v508
        %v815 = vunpack.c.h.b16 %v508
        %v816 = vunpack.c.l.b16 %v509
        %v817 = vunpack.c.h.b16 %v509
        %v818 = vunpack.c.l.b16 %v510
        %v819 = vunpack.c.h.b16 %v510
        %v820 = vunpack.c.l.b16 %v511
        %v821 = vunpack.c.h.b16 %v511
        %v822 = vunpack.c.l.b16 %v512
        %v823 = vunpack.c.h.b16 %v512
        %v824 = vunpack.c.l.b16 %v513
        %v825 = vunpack.c.h.b16 %v513
        %v826 = vunpack.c.l.b16 %v514
        %v827 = vunpack.c.h.b16 %v514
        %v828 = vunpack.c.l.b16 %v515
        %v829 = vunpack.c.h.b16 %v515
        %v830 = vunpack.c.l.b16 %v516
        %v831 = vunpack.c.h.b16 %v516
        %v832 = vunpack.c.l.b16 %v517
        %v833 = vunpack.c.h.b16 %v517
        %v834 = vunpack.c.l.b16 %v518
        %v835 = vunpack.c.h.b16 %v518
        %v836 = vunpack.c.l.b16 %v519
        %v837 = vunpack.c.h.b16 %v519
        %v838 = vunpack.c.l.b16 %v520
        %v839 = vunpack.c.h.b16 %v520
        %v840 = vunpack.c.l.b16 %v521
        %v841 = vunpack.c.h.b16 %v521
        %v842 = vunpack.c.l.b16 %v522
        %v843 = vunpack.c.h.b16 %v522
        %v844 = vunpack.c.l.b16 %v523
        %v845 = vunpack.c.h.b16 %v523
        %v846 = vunpack.c.l.b16 %v524
        %v847 = vunpack.c.h.b16 %v524
        %v848 = vunpack.c.l.b16 %v525
        %v849 = vunpack.c.h.b16 %v525
        %v850 = vunpack.c.l.b16 %v526
        %v851 = vunpack.c.h.b16 %v526
        %v852 = vunpack.c.l.b16 %v527
        %v853 = vunpack.c.h.b16 %v527
        %v854 = vunpack.c.l.b16 %v528
        %v855 = vunpack.c.h.b16 %v528
        %v856 = vunpack.c.l.b16 %v529
        %v857 = vunpack.c.h.b16 %v529
        %v858 = vunpack.c.l.b16 %v530
        %v859 = vunpack.c.h.b16 %v530
        %v860 = vunpack.c.l.b16 %v531
        %v861 = vunpack.c.h.b16 %v531
        %v862 = vunpack.c.l.b16 %v532
        %v863 = vunpack.c.h.b16 %v532
        %v864 = vunpack.c.l.b16 %v533
        %v865 = vunpack.c.h.b16 %v533
        %v866 = vunpack.c.l.b16 %v534
        %v867 = vunpack.c.h.b16 %v534
        %v868 = vunpack.c.l.b16 %v535
        %v869 = vunpack.c.h.b16 %v535
        %v870 = vunpack.c.l.b16 %v536
        %v871 = vunpack.c.h.b16 %v536
        %v872 = vunpack.c.l.b16 %v537
        %v873 = vunpack.c.h.b16 %v537
        %v874 = vunpack.c.l.b16 %v538
        %v875 = vunpack.c.h.b16 %v538
        %v876 = vunpack.c.l.b16 %v539
        %v877 = vunpack.c.h.b16 %v539
        %v878 = vunpack.c.l.b16 %v540
        %v879 = vunpack.c.h.b16 %v540
        %v880 = vunpack.c.l.b16 %v541
        %v881 = vunpack.c.h.b16 %v541
        %v882 = vunpack.c.l.b16 %v542
        %v883 = vunpack.c.h.b16 %v542
        %v884 = vunpack.c.l.b16 %v543
        %v885 = vunpack.c.h.b16 %v543
        %v886 = vunpack.c.l.b16 %v544
        %v887 = vunpack.c.h.b16 %v544
        %v888 = vunpack.c.l.b16 %v545
        %v889 = vunpack.c.h.b16 %v545
        %v890 = vunpack.c.l.b16 %v546
        %v891 = vunpack.c.h.b16 %v546
        %v892 = vunpack.c.l.b16 %v547
        %v893 = vunpack.c.h.b16 %v547
        %v894 = vunpack.c.l.b16 %v548
        %v895 = vunpack.c.h.b16 %v548
        %v896 = vunpack.c.l.b16 %v549
        %v897 = vunpack.c.h.b16 %v549
        %v898 = vunpack.c.l.b16 %v550
        %v899 = vunpack.c.h.b16 %v550
        %v900 = vunpack.c.l.b16 %v551
        %v901 = vunpack.c.h.b16 %v551
        %v902 = vunpack.c.l.b16 %v552
        %v903 = vunpack.c.h.b16 %v552
        %v904 = vunpack.c.l.b16 %v553
        %v905 = vunpack.c.h.b16 %v553
        %v906 = vunpack.c.l.b16 %v554
        %v907 = vunpack.c.h.b16 %v554
        %v908 = vunpack.c.l.b16 %v555
        %v909 = vunpack.c.h.b16 %v555
        %v910 = vunpack.c.l.b16 %v556
        %v911 = vunpack.c.h.b16 %v556
        %v912 = vunpack.c.l.b16 %v557
        %v913 = vunpack.c.h.b16 %v557
        %v914 = vunpack.c.l.b16 %v558
        %v915 = vunpack.c.h.b16 %v558
        %v916 = vunpack.c.l.b16 %v559
        %v917 = vunpack.c.h.b16 %v559
        %v918 = vunpack.c.l.b16 %v560
        %v919 = vunpack.c.h.b16 %v560
        %v920 = vunpack.c.l.b16 %v561
        %v921 = vunpack.c.h.b16 %v561
        %v922 = vunpack.c.l.b16 %v562
        %v923 = vunpack.c.h.b16 %v562
        %v924 = vunpack.c.l.b16 %v563
        %v925 = vunpack.c.h.b16 %v563
        %v926 = vunpack.c.l.b16 %v564
        %v927 = vunpack.c.h.b16 %v564
        %v928 = vunpack.c.l.b16 %v565
        %v929 = vunpack.c.h.b16 %v565
        %v930 = vunpack.c.l.b16 %v566
        %v931 = vunpack.c.h.b16 %v566
        %v932 = vunpack.c.l.b16 %v567
        %v933 = vunpack.c.h.b16 %v567
        %v934 = vunpack.c.l.b16 %v568
        %v935 = vunpack.c.h.b16 %v568
        %v936 = vunpack.c.l.b16 %v569
        %v937 = vunpack.c.h.b16 %v569
        %v938 = vunpack.c.l.b16 %v570
        %v939 = vunpack.c.h.b16 %v570
        %v940 = vunpack.c.l.b16 %v571
        %v941 = vunpack.c.h.b16 %v571
        %v942 = vunpack.c.l.b16 %v572
        %v943 = vunpack.c.h.b16 %v572
        %v944 = vunpack.c.l.b16 %v573
        %v945 = vunpack.c.h.b16 %v573
        %v946 = vunpack.c.l.b16 %v574
        %v947 = vunpack.c.h.b16 %v574
        %v948 = vunpack.c.l.b16 %v575
        %v949 = vunpack.c.h.b16 %v575
        %v950 = vunpack.c.l.b16 %v576
        %v951 = vunpack.c.h.b16 %v576
        %v952 = vunpack.c.l.b16 %v577
        %v953 = vunpack.c.h.b16 %v577
        %v954 = vunpack.c.l.b16 %v578
        %v955 = vunpack.c.h.b16 %v578
        %v956 = vunpack.c.l.b16 %v579
        %v957 = vunpack.c.h.b16 %v579
        %v958 = vunpack.c.l.b16 %v580
        %v959 = vunpack.c.h.b16 %v580
        %v960 = vunpack.c.l.b16 %v581
        %v961 = vunpack.c.h.b16 %v581
        %v962 = vunpack.c.l.b16 %v582
        %v963 = vunpack.c.h.b16 %v582
        %v964 = vunpack.c.l.b16 %v583
        %v965 = vunpack.c.h.b16 %v583
        %v966 = vunpack.c.l.b16 %v584
        %v967 = vunpack.c.h.b16 %v584
        %v968 = vunpack.c.l.b16 %v585
        %v969 = vunpack.c.h.b16 %v585
        %v970 = vpack.c.b16 %v722, %v714
        %v971 = vpack.c.b16 %v723, %v715
        %v972 = vpack.c.b16 %v724, %v716
        %v973 = vpack.c.b16 %v725, %v717
        %v974 = vpack.c.b16 %v726, %v718
        %v975 = vpack.c.b16 %v727, %v719
        %v976 = vpack.c.b16 %v728, %v720
        %v977 = vpack.c.b16 %v729, %v721
        %v978 = vpack.c.b16 %v738, %v730
        %v979 = vpack.c.b16 %v739, %v731
        %v980 = vpack.c.b16 %v740, %v732
        %v981 = vpack.c.b16 %v741, %v733
        %v982 = vpack.c.b16 %v742, %v734
        %v983 = vpack.c.b16 %v743, %v735
        %v984 = vpack.c.b16 %v744, %v736
        %v985 = vpack.c.b16 %v745, %v737
        %v986 = vpack.c.b16 %v754, %v746
        %v987 = vpack.c.b16 %v755, %v747
        %v988 = vpack.c.b16 %v756, %v748
        %v989 = vpack.c.b16 %v757, %v749
        %v990 = vpack.c.b16 %v758, %v750
        %v991 = vpack.c.b16 %v759, %v751
        %v992 = vpack.c.b16 %v760, %v752
        %v993 = vpack.c.b16 %v761, %v753
        %v994 = vpack.c.b16 %v770, %v762
        %v995 = vpack.c.b16 %v771, %v763
        %v996 = vpack.c.b16 %v772, %v764
        %v997 = vpack.c.b16 %v773, %v765
        %v998 = vpack.c.b16 %v774, %v766
        %v999 = vpack.c.b16 %v775, %v767
        %v1000 = vpack.c.b16 %v776, %v768
        %v1001 = vpack.c.b16 %v777, %v769
        %v1002 = vpack.c.b16 %v786, %v778
        %v1003 = vpack.c.b16 %v787, %v779
        %v1004 = vpack.c.b16 %v788, %v780
        %v1005 = vpack.c.b16 %v789, %v781
        %v1006 = vpack.c.b16 %v790, %v782
        %v1007 = vpack.c.b16 %v791, %v783
        %v1008 = vpack.c.b16 %v792, %v784
        %v1009 = vpack.c.b16 %v793, %v785
        %v1010 = vpack.c.b16 %v802, %v794
        %v1011 = vpack.c.b16 %v803, %v795
        %v1012 = vpack.c.b16 %v804, %v796
        %v1013 = vpack.c.b16 %v805, %v797
        %v1014 = vpack.c.b16 %v806, %v798
        %v1015 = vpack.c.b16 %v807, %v799
        %v1016 = vpack.c.b16 %v808, %v800
        %v1017 = vpack.c.b16 %v809, %v801
        %v1018 = vpack.c.b16 %v818, %v810
        %v1019 = vpack.c.b16 %v819, %v811
        %v1020 = vpack.c.b16 %v820, %v812
        %v1021 = vpack.c.b16 %v821, %v813
        %v1022 = vpack.c.b16 %v822, %v814
        %v1023 = vpack.c.b16 %v823, %v815
        %v1024 = vpack.c.b16 %v824, %v816
        %v1025 = vpack.c.b16 %v825, %v817
        %v1026 = vpack.c.b16 %v834, %v826
        %v1027 = vpack.c.b16 %v835, %v827
        %v1028 = vpack.c.b16 %v836, %v828
        %v1029 = vpack.c.b16 %v837, %v829
        %v1030 = vpack.c.b16 %v838, %v830
        %v1031 = vpack.c.b16 %v839, %v831
        %v1032 = vpack.c.b16 %v840, %v832
        %v1033 = vpack.c.b16 %v841, %v833
        %v1034 = vpack.c.b16 %v850, %v842
        %v1035 = vpack.c.b16 %v851, %v843
        %v1036 = vpack.c.b16 %v852, %v844
        %v1037 = vpack.c.b16 %v853, %v845
        %v1038 = vpack.c.b16 %v854, %v846
        %v1039 = vpack.c.b16 %v855, %v847
        %v1040 = vpack.c.b16 %v856, %v848
        %v1041 = vpack.c.b16 %v857, %v849
        %v1042 = vpack.c.b16 %v866, %v858
        %v1043 = vpack.c.b16 %v867, %v859
        %v1044 = vpack.c.b16 %v868, %v860
        %v1045 = vpack.c.b16 %v869, %v861
        %v1046 = vpack.c.b16 %v870, %v862
        %v1047 = vpack.c.b16 %v871, %v863
        %v1048 = vpack.c.b16 %v872, %v864
        %v1049 = vpack.c.b16 %v873, %v865
        %v1050 = vpack.c.b16 %v882, %v874
        %v1051 = vpack.c.b16 %v883, %v875
        %v1052 = vpack.c.b16 %v884, %v876
        %v1053 = vpack.c.b16 %v885, %v877
        %v1054 = vpack.c.b16 %v886, %v878
        %v1055 = vpack.c.b16 %v887, %v879
        %v1056 = vpack.c.b16 %v888, %v880
        %v1057 = vpack.c.b16 %v889, %v881
        %v1058 = vpack.c.b16 %v898, %v890
        %v1059 = vpack.c.b16 %v899, %v891
        %v1060 = vpack.c.b16 %v900, %v892
        %v1061 = vpack.c.b16 %v901, %v893
        %v1062 = vpack.c.b16 %v902, %v894
        %v1063 = vpack.c.b16 %v903, %v895
        %v1064 = vpack.c.b16 %v904, %v896
        %v1065 = vpack.c.b16 %v905, %v897
        %v1066 = vpack.c.b16 %v914, %v906
        %v1067 = vpack.c.b16 %v915, %v907
        %v1068 = vpack.c.b16 %v916, %v908
        %v1069 = vpack.c.b16 %v917, %v909
        %v1070 = vpack.c.b16 %v918, %v910
        %v1071 = vpack.c.b16 %v919, %v911
        %v1072 = vpack.c.b16 %v920, %v912
        %v1073 = vpack.c.b16 %v921, %v913
        %v1074 = vpack.c.b16 %v930, %v922
        %v1075 = vpack.c.b16 %v931, %v923
        %v1076 = vpack.c.b16 %v932, %v924
        %v1077 = vpack.c.b16 %v933, %v925
        %v1078 = vpack.c.b16 %v934, %v926
        %v1079 = vpack.c.b16 %v935, %v927
        %v1080 = vpack.c.b16 %v936, %v928
        %v1081 = vpack.c.b16 %v937, %v929
        %v1082 = vpack.c.b16 %v946, %v938
        %v1083 = vpack.c.b16 %v947, %v939
        %v1084 = vpack.c.b16 %v948, %v940
        %v1085 = vpack.c.b16 %v949, %v941
        %v1086 = vpack.c.b16 %v950, %v942
        %v1087 = vpack.c.b16 %v951, %v943
        %v1088 = vpack.c.b16 %v952, %v944
        %v1089 = vpack.c.b16 %v953, %v945
        %v1090 = vpack.c.b16 %v962, %v954
        %v1091 = vpack.c.b16 %v963, %v955
        %v1092 = vpack.c.b16 %v964, %v956
        %v1093 = vpack.c.b16 %v965, %v957
        %v1094 = vpack.c.b16 %v966, %v958
        %v1095 = vpack.c.b16 %v967, %v959
        %v1096 = vpack.c.b16 %v968, %v960
        %v1097 = vpack.c.b16 %v969, %v961
        %1226 = vmatpush.bf16.msra.mxu0 %v1026
        %1227 = vmatpush.bf16.msra.mxu0 %v1018
        %1228 = vmatpush.bf16.msra.mxu0 %v1010
        %1229 = vmatpush.bf16.msra.mxu0 %v1002
        %1230 = vmatpush.bf16.msra.mxu0 %v994
        %1231 = vmatpush.bf16.msra.mxu0 %v986
        %1232 = vmatpush.bf16.msra.mxu0 %v978
        %1233 = vmatpush.bf16.msra.mxu0 %v970
        %1234 = vmatmul.bf16.gmra.mxu0 %v448
        %v1235 = vpop.f32.mrf.mxu0
        %v1236 = vadd.f32 0.0, %v1235
        %v1237 = vpop.f32.mrf.mxu0
        %1238 = vdwg.mxu0
        %1239 = vmatpush.bf16.msra.mxu0 %v1090
        %1240 = vmatpush.bf16.msra.mxu0 %v1082
        %1241 = vmatpush.bf16.msra.mxu0 %v1074
        %1242 = vmatpush.bf16.msra.mxu0 %v1066
        %1243 = vmatpush.bf16.msra.mxu0 %v1058
        %1244 = vmatpush.bf16.msra.mxu0 %v1050
        %1245 = vmatpush.bf16.msra.mxu0 %v1042
        %1246 = vmatpush.bf16.msra.mxu0 %v1034
        %1247 = vmatmul.bf16.gmra.mxu0 %v449
        %v1248 = vpop.f32.mrf.mxu0
        %v1249 = vadd.f32 %v1236, %v1248
        %v1250 = vpop.f32.mrf.mxu0
        %1251 = vdwg.mxu0
        %1252 = vmatpush.bf16.msra.mxu0 %v1027
        %1253 = vmatpush.bf16.msra.mxu0 %v1019
        %1254 = vmatpush.bf16.msra.mxu0 %v1011
        %1255 = vmatpush.bf16.msra.mxu0 %v1003
        %1256 = vmatpush.bf16.msra.mxu0 %v995
        %1257 = vmatpush.bf16.msra.mxu0 %v987
        %1258 = vmatpush.bf16.msra.mxu0 %v979
        %1259 = vmatpush.bf16.msra.mxu0 %v971
        %1260 = vmatmul.bf16.gmra.mxu0 %v448
        %v1261 = vpop.f32.mrf.mxu0
        %v1262 = vadd.f32 0.0, %v1261
        %v1263 = vpop.f32.mrf.mxu0
        %1264 = vdwg.mxu0
        %1265 = vmatpush.bf16.msra.mxu0 %v1091
        %1266 = vmatpush.bf16.msra.mxu0 %v1083
        %1267 = vmatpush.bf16.msra.mxu0 %v1075
        %1268 = vmatpush.bf16.msra.mxu0 %v1067
        %1269 = vmatpush.bf16.msra.mxu0 %v1059
        %1270 = vmatpush.bf16.msra.mxu0 %v1051
        %1271 = vmatpush.bf16.msra.mxu0 %v1043
        %1272 = vmatpush.bf16.msra.mxu0 %v1035
        %1273 = vmatmul.bf16.gmra.mxu0 %v449
        %v1274 = vpop.f32.mrf.mxu0
        %v1275 = vadd.f32 %v1262, %v1274
        %v1276 = vpop.f32.mrf.mxu0
        %1277 = vdwg.mxu0
        %1278 = vmatpush.bf16.msra.mxu0 %v1028
        %1279 = vmatpush.bf16.msra.mxu0 %v1020
        %1280 = vmatpush.bf16.msra.mxu0 %v1012
        %1281 = vmatpush.bf16.msra.mxu0 %v1004
        %1282 = vmatpush.bf16.msra.mxu0 %v996
        %1283 = vmatpush.bf16.msra.mxu0 %v988
        %1284 = vmatpush.bf16.msra.mxu0 %v980
        %1285 = vmatpush.bf16.msra.mxu0 %v972
        %1286 = vmatmul.bf16.gmra.mxu0 %v448
        %v1287 = vpop.f32.mrf.mxu0
        %v1288 = vadd.f32 0.0, %v1287
        %v1289 = vpop.f32.mrf.mxu0
        %1290 = vdwg.mxu0
        %1291 = vmatpush.bf16.msra.mxu0 %v1092
        %1292 = vmatpush.bf16.msra.mxu0 %v1084
        %1293 = vmatpush.bf16.msra.mxu0 %v1076
        %1294 = vmatpush.bf16.msra.mxu0 %v1068
        %1295 = vmatpush.bf16.msra.mxu0 %v1060
        %1296 = vmatpush.bf16.msra.mxu0 %v1052
        %1297 = vmatpush.bf16.msra.mxu0 %v1044
        %1298 = vmatpush.bf16.msra.mxu0 %v1036
        %1299 = vmatmul.bf16.gmra.mxu0 %v449
        %v1300 = vpop.f32.mrf.mxu0
        %v1301 = vadd.f32 %v1288, %v1300
        %v1302 = vpop.f32.mrf.mxu0
        %1303 = vdwg.mxu0
        %1304 = vmatpush.bf16.msra.mxu0 %v1029
        %1305 = vmatpush.bf16.msra.mxu0 %v1021
        %1306 = vmatpush.bf16.msra.mxu0 %v1013
        %1307 = vmatpush.bf16.msra.mxu0 %v1005
        %1308 = vmatpush.bf16.msra.mxu0 %v997
        %1309 = vmatpush.bf16.msra.mxu0 %v989
        %1310 = vmatpush.bf16.msra.mxu0 %v981
        %1311 = vmatpush.bf16.msra.mxu0 %v973
        %1312 = vmatmul.bf16.gmra.mxu0 %v448
        %v1313 = vpop.f32.mrf.mxu0
        %v1314 = vadd.f32 0.0, %v1313
        %v1315 = vpop.f32.mrf.mxu0
        %1316 = vdwg.mxu0
        %1317 = vmatpush.bf16.msra.mxu0 %v1093
        %1318 = vmatpush.bf16.msra.mxu0 %v1085
        %1319 = vmatpush.bf16.msra.mxu0 %v1077
        %1320 = vmatpush.bf16.msra.mxu0 %v1069
        %1321 = vmatpush.bf16.msra.mxu0 %v1061
        %1322 = vmatpush.bf16.msra.mxu0 %v1053
        %1323 = vmatpush.bf16.msra.mxu0 %v1045
        %1324 = vmatpush.bf16.msra.mxu0 %v1037
        %1325 = vmatmul.bf16.gmra.mxu0 %v449
        %v1326 = vpop.f32.mrf.mxu0
        %v1327 = vadd.f32 %v1314, %v1326
        %v1328 = vpop.f32.mrf.mxu0
        %1329 = vdwg.mxu0
        %1330 = vmatpush.bf16.msra.mxu0 %v1030
        %1331 = vmatpush.bf16.msra.mxu0 %v1022
        %1332 = vmatpush.bf16.msra.mxu0 %v1014
        %1333 = vmatpush.bf16.msra.mxu0 %v1006
        %1334 = vmatpush.bf16.msra.mxu0 %v998
        %1335 = vmatpush.bf16.msra.mxu0 %v990
        %1336 = vmatpush.bf16.msra.mxu0 %v982
        %1337 = vmatpush.bf16.msra.mxu0 %v974
        %1338 = vmatmul.bf16.gmra.mxu0 %v448
        %v1339 = vpop.f32.mrf.mxu0
        %v1340 = vadd.f32 0.0, %v1339
        %v1341 = vpop.f32.mrf.mxu0
        %1342 = vdwg.mxu0
        %1343 = vmatpush.bf16.msra.mxu0 %v1094
        %1344 = vmatpush.bf16.msra.mxu0 %v1086
        %1345 = vmatpush.bf16.msra.mxu0 %v1078
        %1346 = vmatpush.bf16.msra.mxu0 %v1070
        %1347 = vmatpush.bf16.msra.mxu0 %v1062
        %1348 = vmatpush.bf16.msra.mxu0 %v1054
        %1349 = vmatpush.bf16.msra.mxu0 %v1046
        %1350 = vmatpush.bf16.msra.mxu0 %v1038
        %1351 = vmatmul.bf16.gmra.mxu0 %v449
        %v1352 = vpop.f32.mrf.mxu0
        %v1353 = vadd.f32 %v1340, %v1352
        %v1354 = vpop.f32.mrf.mxu0
        %1355 = vdwg.mxu0
        %1356 = vmatpush.bf16.msra.mxu0 %v1031
        %1357 = vmatpush.bf16.msra.mxu0 %v1023
        %1358 = vmatpush.bf16.msra.mxu0 %v1015
        %1359 = vmatpush.bf16.msra.mxu0 %v1007
        %1360 = vmatpush.bf16.msra.mxu0 %v999
        %1361 = vmatpush.bf16.msra.mxu0 %v991
        %1362 = vmatpush.bf16.msra.mxu0 %v983
        %1363 = vmatpush.bf16.msra.mxu0 %v975
        %1364 = vmatmul.bf16.gmra.mxu0 %v448
        %v1365 = vpop.f32.mrf.mxu0
        %v1366 = vadd.f32 0.0, %v1365
        %v1367 = vpop.f32.mrf.mxu0
        %1368 = vdwg.mxu0
        %1369 = vmatpush.bf16.msra.mxu0 %v1095
        %1370 = vmatpush.bf16.msra.mxu0 %v1087
        %1371 = vmatpush.bf16.msra.mxu0 %v1079
        %1372 = vmatpush.bf16.msra.mxu0 %v1071
        %1373 = vmatpush.bf16.msra.mxu0 %v1063
        %1374 = vmatpush.bf16.msra.mxu0 %v1055
        %1375 = vmatpush.bf16.msra.mxu0 %v1047
        %1376 = vmatpush.bf16.msra.mxu0 %v1039
        %1377 = vmatmul.bf16.gmra.mxu0 %v449
        %v1378 = vpop.f32.mrf.mxu0
        %v1379 = vadd.f32 %v1366, %v1378
        %v1380 = vpop.f32.mrf.mxu0
        %1381 = vdwg.mxu0
        %1382 = vmatpush.bf16.msra.mxu0 %v1032
        %1383 = vmatpush.bf16.msra.mxu0 %v1024
        %1384 = vmatpush.bf16.msra.mxu0 %v1016
        %1385 = vmatpush.bf16.msra.mxu0 %v1008
        %1386 = vmatpush.bf16.msra.mxu0 %v1000
        %1387 = vmatpush.bf16.msra.mxu0 %v992
        %1388 = vmatpush.bf16.msra.mxu0 %v984
        %1389 = vmatpush.bf16.msra.mxu0 %v976
        %1390 = vmatmul.bf16.gmra.mxu0 %v448
        %v1391 = vpop.f32.mrf.mxu0
        %v1392 = vadd.f32 0.0, %v1391
        %v1393 = vpop.f32.mrf.mxu0
        %1394 = vdwg.mxu0
        %1395 = vmatpush.bf16.msra.mxu0 %v1096
        %1396 = vmatpush.bf16.msra.mxu0 %v1088
        %1397 = vmatpush.bf16.msra.mxu0 %v1080
        %1398 = vmatpush.bf16.msra.mxu0 %v1072
        %1399 = vmatpush.bf16.msra.mxu0 %v1064
        %1400 = vmatpush.bf16.msra.mxu0 %v1056
        %1401 = vmatpush.bf16.msra.mxu0 %v1048
        %1402 = vmatpush.bf16.msra.mxu0 %v1040
        %1403 = vmatmul.bf16.gmra.mxu0 %v449
        %v1404 = vpop.f32.mrf.mxu0
        %v1405 = vadd.f32 %v1392, %v1404
        %v1406 = vpop.f32.mrf.mxu0
        %1407 = vdwg.mxu0
        %1408 = vmatpush.bf16.msra.mxu0 %v1033
        %1409 = vmatpush.bf16.msra.mxu0 %v1025
        %1410 = vmatpush.bf16.msra.mxu0 %v1017
        %1411 = vmatpush.bf16.msra.mxu0 %v1009
        %1412 = vmatpush.bf16.msra.mxu0 %v1001
        %1413 = vmatpush.bf16.msra.mxu0 %v993
        %1414 = vmatpush.bf16.msra.mxu0 %v985
        %1415 = vmatpush.bf16.msra.mxu0 %v977
        %1416 = vmatmul.bf16.gmra.mxu0 %v448
        %v1417 = vpop.f32.mrf.mxu0
        %v1418 = vadd.f32 0.0, %v1417
        %v1419 = vpop.f32.mrf.mxu0
        %1420 = vdwg.mxu0
        %1421 = vmatpush.bf16.msra.mxu0 %v1097
        %1422 = vmatpush.bf16.msra.mxu0 %v1089
        %1423 = vmatpush.bf16.msra.mxu0 %v1081
        %1424 = vmatpush.bf16.msra.mxu0 %v1073
        %1425 = vmatpush.bf16.msra.mxu0 %v1065
        %1426 = vmatpush.bf16.msra.mxu0 %v1057
        %1427 = vmatpush.bf16.msra.mxu0 %v1049
        %1428 = vmatpush.bf16.msra.mxu0 %v1041
        %1429 = vmatmul.bf16.gmra.mxu0 %v449
        %v1430 = vpop.f32.mrf.mxu0
        %v1431 = vadd.f32 %v1418, %v1430
        %v1432 = vpop.f32.mrf.mxu0
        %1433 = vdwg.mxu0
        %v1434 = vadd.f32 %v450, %v1249
        %v1435 = vadd.f32 %v451, %v1275
        %v1436 = vadd.f32 %v452, %v1301
        %v1437 = vadd.f32 %v453, %v1327
        %v1438 = vadd.f32 %v454, %v1353
        %v1439 = vadd.f32 %v455, %v1379
        %v1440 = vadd.f32 %v456, %v1405
        %v1441 = vadd.f32 %v457, %v1431
        %1442 = vst [vmem:[#allocation2] sm:$0xff] %v1434
        %1443 = vst [vmem:[#allocation2 + $0x8] sm:$0xff] %v1435
        %1444 = vst [vmem:[#allocation2 + $0x10] sm:$0xff] %v1436
        %1445 = vst [vmem:[#allocation2 + $0x18] sm:$0xff] %v1437
        %1446 = vst [vmem:[#allocation2 + $0x20] sm:$0xff] %v1438
        %1447 = vst [vmem:[#allocation2 + $0x28] sm:$0xff] %v1439
        %1448 = vst [vmem:[#allocation2 + $0x30] sm:$0xff] %v1440
        %1449 = vst [vmem:[#allocation2 + $0x38] sm:$0xff] %v1441
        %p1450 = scmp.eq.s32.totalorder %s37, 3
        // Predicated region
        $region69: #{tpu_custom_call.1} parent=43 // pred_check
          %p1451 = pneg %p1450
        $region70: #{tpu_custom_call.1} parent=43 // pred_check_branch
          %1453 = sbr.rel (%p1451) target = $region72
        $region71: #{tpu_custom_call.1} parent=43 // pred_region
          %v1454 = vld [vmem:[#allocation2] sm:$0xff]
          %v1455 = vld [vmem:[#allocation2 + $0x8] sm:$0xff]
          %v1456 = vld [vmem:[#allocation2 + $0x10] sm:$0xff]
          %v1457 = vld [vmem:[#allocation2 + $0x18] sm:$0xff]
          %v1458 = vld [vmem:[#allocation2 + $0x20] sm:$0xff]
          %v1459 = vld [vmem:[#allocation2 + $0x28] sm:$0xff]
          %v1460 = vld [vmem:[#allocation2 + $0x30] sm:$0xff]
          %v1461 = vld [vmem:[#allocation2 + $0x38] sm:$0xff]
          %v1462 = vld [vmem:[#allocation9] sm:$0xff]
          %v1464 = vperm.slane %v1462, 0
          %v1465 = vperm.slane %v1462, 1
          %v1466 = vperm.slane %v1462, 2
          %v1467 = vperm.slane %v1462, 3
          %v1468 = vperm.slane %v1462, 4
          %v1469 = vperm.slane %v1462, 5
          %v1470 = vperm.slane %v1462, 6
          %v1471 = vperm.slane %v1462, 7
          %v1480 = vadd.f32 %v1454, %v1464
          %v1481 = vadd.f32 %v1455, %v1465
          %v1482 = vadd.f32 %v1456, %v1466
          %v1483 = vadd.f32 %v1457, %v1467
          %v1484 = vadd.f32 %v1458, %v1468
          %v1485 = vadd.f32 %v1459, %v1469
          %v1486 = vadd.f32 %v1460, %v1470
          %v1487 = vadd.f32 %v1461, %v1471
          %v1488 = vtanh.pop %v1480
          %v1489 = vtanh.pop %v1481
          %v1490 = vtanh.pop %v1482
          %v1491 = vtanh.pop %v1483
          %v1492 = vtanh.pop %v1484
          %v1493 = vtanh.pop %v1485
          %v1494 = vtanh.pop %v1486
          %v1495 = vtanh.pop %v1487
          %v1496 = vpack.c.bf16 %v1488, %v1488
          %v1497 = vpack.c.bf16 %v1489, %v1489
          %v1498 = vpack.c.bf16 %v1490, %v1490
          %v1499 = vpack.c.bf16 %v1491, %v1491
          %v1500 = vpack.c.bf16 %v1492, %v1492
          %v1501 = vpack.c.bf16 %v1493, %v1493
          %v1502 = vpack.c.bf16 %v1494, %v1494
          %v1503 = vpack.c.bf16 %v1495, %v1495
          %v1504 = vld [vmem:[%s4] sm:$0xf]
          %v1505 = vld [vmem:[%s4 + $0x4] sm:$0xf]
          %v1506 = vld [vmem:[%s4 + $0x8] sm:$0xf]
          %v1507 = vld [vmem:[%s4 + $0xc] sm:$0xf]
          %v1508 = vld [vmem:[%s4 + $0x10] sm:$0xf]
          %v1509 = vld [vmem:[%s4 + $0x14] sm:$0xf]
          %v1510 = vld [vmem:[%s4 + $0x18] sm:$0xf]
          %v1511 = vld [vmem:[%s4 + $0x1c] sm:$0xf]
          %v1512 = vld [vmem:[%s4 + $0x20] sm:$0xf]
          %v1513 = vld [vmem:[%s4 + $0x24] sm:$0xf]
          %v1514 = vld [vmem:[%s4 + $0x28] sm:$0xf]
          %v1515 = vld [vmem:[%s4 + $0x2c] sm:$0xf]
          %v1516 = vld [vmem:[%s4 + $0x30] sm:$0xf]
          %v1517 = vld [vmem:[%s4 + $0x34] sm:$0xf]
          %v1518 = vld [vmem:[%s4 + $0x38] sm:$0xf]
          %v1519 = vld [vmem:[%s4 + $0x3c] sm:$0xf]
          %v1520 = vld [vmem:[%s4 + $0x40] sm:$0xf]
          %v1521 = vld [vmem:[%s4 + $0x44] sm:$0xf]
          %v1522 = vld [vmem:[%s4 + $0x48] sm:$0xf]
          %v1523 = vld [vmem:[%s4 + $0x4c] sm:$0xf]
          %v1524 = vld [vmem:[%s4 + $0x50] sm:$0xf]
          %v1525 = vld [vmem:[%s4 + $0x54] sm:$0xf]
          %v1526 = vld [vmem:[%s4 + $0x58] sm:$0xf]
          %v1527 = vld [vmem:[%s4 + $0x5c] sm:$0xf]
          %v1528 = vld [vmem:[%s4 + $0x60] sm:$0xf]
          %v1529 = vld [vmem:[%s4 + $0x64] sm:$0xf]
          %v1530 = vld [vmem:[%s4 + $0x68] sm:$0xf]
          %v1531 = vld [vmem:[%s4 + $0x6c] sm:$0xf]
          %v1532 = vld [vmem:[%s4 + $0x70] sm:$0xf]
          %v1533 = vld [vmem:[%s4 + $0x74] sm:$0xf]
          %v1534 = vld [vmem:[%s4 + $0x78] sm:$0xf]
          %v1535 = vld [vmem:[%s4 + $0x7c] sm:$0xf]
          %v1536 = vld [vmem:[%s4 + $0x80] sm:$0xf]
          %v1537 = vld [vmem:[%s4 + $0x84] sm:$0xf]
          %v1538 = vld [vmem:[%s4 + $0x88] sm:$0xf]
          %v1539 = vld [vmem:[%s4 + $0x8c] sm:$0xf]
          %v1540 = vld [vmem:[%s4 + $0x90] sm:$0xf]
          %v1541 = vld [vmem:[%s4 + $0x94] sm:$0xf]
          %v1542 = vld [vmem:[%s4 + $0x98] sm:$0xf]
          %v1543 = vld [vmem:[%s4 + $0x9c] sm:$0xf]
          %v1544 = vld [vmem:[%s4 + $0xa0] sm:$0xf]
          %v1545 = vld [vmem:[%s4 + $0xa4] sm:$0xf]
          %v1546 = vld [vmem:[%s4 + $0xa8] sm:$0xf]
          %v1547 = vld [vmem:[%s4 + $0xac] sm:$0xf]
          %v1548 = vld [vmem:[%s4 + $0xb0] sm:$0xf]
          %v1549 = vld [vmem:[%s4 + $0xb4] sm:$0xf]
          %v1550 = vld [vmem:[%s4 + $0xb8] sm:$0xf]
          %v1551 = vld [vmem:[%s4 + $0xbc] sm:$0xf]
          %v1552 = vld [vmem:[%s4 + $0xc0] sm:$0xf]
          %v1553 = vld [vmem:[%s4 + $0xc4] sm:$0xf]
          %v1554 = vld [vmem:[%s4 + $0xc8] sm:$0xf]
          %v1555 = vld [vmem:[%s4 + $0xcc] sm:$0xf]
          %v1556 = vld [vmem:[%s4 + $0xd0] sm:$0xf]
          %v1557 = vld [vmem:[%s4 + $0xd4] sm:$0xf]
          %v1558 = vld [vmem:[%s4 + $0xd8] sm:$0xf]
          %v1559 = vld [vmem:[%s4 + $0xdc] sm:$0xf]
          %v1560 = vld [vmem:[%s4 + $0xe0] sm:$0xf]
          %v1561 = vld [vmem:[%s4 + $0xe4] sm:$0xf]
          %v1562 = vld [vmem:[%s4 + $0xe8] sm:$0xf]
          %v1563 = vld [vmem:[%s4 + $0xec] sm:$0xf]
          %v1564 = vld [vmem:[%s4 + $0xf0] sm:$0xf]
          %v1565 = vld [vmem:[%s4 + $0xf4] sm:$0xf]
          %v1566 = vld [vmem:[%s4 + $0xf8] sm:$0xf]
          %v1567 = vld [vmem:[%s4 + $0xfc] sm:$0xf]
          %v1568 = vld [vmem:[%s4 + $0x100] sm:$0xf]
          %v1569 = vld [vmem:[%s4 + $0x104] sm:$0xf]
          %v1570 = vld [vmem:[%s4 + $0x108] sm:$0xf]
          %v1571 = vld [vmem:[%s4 + $0x10c] sm:$0xf]
          %v1572 = vld [vmem:[%s4 + $0x110] sm:$0xf]
          %v1573 = vld [vmem:[%s4 + $0x114] sm:$0xf]
          %v1574 = vld [vmem:[%s4 + $0x118] sm:$0xf]
          %v1575 = vld [vmem:[%s4 + $0x11c] sm:$0xf]
          %v1576 = vld [vmem:[%s4 + $0x120] sm:$0xf]
          %v1577 = vld [vmem:[%s4 + $0x124] sm:$0xf]
          %v1578 = vld [vmem:[%s4 + $0x128] sm:$0xf]
          %v1579 = vld [vmem:[%s4 + $0x12c] sm:$0xf]
          %v1580 = vld [vmem:[%s4 + $0x130] sm:$0xf]
          %v1581 = vld [vmem:[%s4 + $0x134] sm:$0xf]
          %v1582 = vld [vmem:[%s4 + $0x138] sm:$0xf]
          %v1583 = vld [vmem:[%s4 + $0x13c] sm:$0xf]
          %v1584 = vld [vmem:[%s4 + $0x140] sm:$0xf]
          %v1585 = vld [vmem:[%s4 + $0x144] sm:$0xf]
          %v1586 = vld [vmem:[%s4 + $0x148] sm:$0xf]
          %v1587 = vld [vmem:[%s4 + $0x14c] sm:$0xf]
          %v1588 = vld [vmem:[%s4 + $0x150] sm:$0xf]
          %v1589 = vld [vmem:[%s4 + $0x154] sm:$0xf]
          %v1590 = vld [vmem:[%s4 + $0x158] sm:$0xf]
          %v1591 = vld [vmem:[%s4 + $0x15c] sm:$0xf]
          %v1592 = vld [vmem:[%s4 + $0x160] sm:$0xf]
          %v1593 = vld [vmem:[%s4 + $0x164] sm:$0xf]
          %v1594 = vld [vmem:[%s4 + $0x168] sm:$0xf]
          %v1595 = vld [vmem:[%s4 + $0x16c] sm:$0xf]
          %v1596 = vld [vmem:[%s4 + $0x170] sm:$0xf]
          %v1597 = vld [vmem:[%s4 + $0x174] sm:$0xf]
          %v1598 = vld [vmem:[%s4 + $0x178] sm:$0xf]
          %v1599 = vld [vmem:[%s4 + $0x17c] sm:$0xf]
          %v1600 = vld [vmem:[%s4 + $0x180] sm:$0xf]
          %v1601 = vld [vmem:[%s4 + $0x184] sm:$0xf]
          %v1602 = vld [vmem:[%s4 + $0x188] sm:$0xf]
          %v1603 = vld [vmem:[%s4 + $0x18c] sm:$0xf]
          %v1604 = vld [vmem:[%s4 + $0x190] sm:$0xf]
          %v1605 = vld [vmem:[%s4 + $0x194] sm:$0xf]
          %v1606 = vld [vmem:[%s4 + $0x198] sm:$0xf]
          %v1607 = vld [vmem:[%s4 + $0x19c] sm:$0xf]
          %v1608 = vld [vmem:[%s4 + $0x1a0] sm:$0xf]
          %v1609 = vld [vmem:[%s4 + $0x1a4] sm:$0xf]
          %v1610 = vld [vmem:[%s4 + $0x1a8] sm:$0xf]
          %v1611 = vld [vmem:[%s4 + $0x1ac] sm:$0xf]
          %v1612 = vld [vmem:[%s4 + $0x1b0] sm:$0xf]
          %v1613 = vld [vmem:[%s4 + $0x1b4] sm:$0xf]
          %v1614 = vld [vmem:[%s4 + $0x1b8] sm:$0xf]
          %v1615 = vld [vmem:[%s4 + $0x1bc] sm:$0xf]
          %v1616 = vld [vmem:[%s4 + $0x1c0] sm:$0xf]
          %v1617 = vld [vmem:[%s4 + $0x1c4] sm:$0xf]
          %v1618 = vld [vmem:[%s4 + $0x1c8] sm:$0xf]
          %v1619 = vld [vmem:[%s4 + $0x1cc] sm:$0xf]
          %v1620 = vld [vmem:[%s4 + $0x1d0] sm:$0xf]
          %v1621 = vld [vmem:[%s4 + $0x1d4] sm:$0xf]
          %v1622 = vld [vmem:[%s4 + $0x1d8] sm:$0xf]
          %v1623 = vld [vmem:[%s4 + $0x1dc] sm:$0xf]
          %v1624 = vld [vmem:[%s4 + $0x1e0] sm:$0xf]
          %v1625 = vld [vmem:[%s4 + $0x1e4] sm:$0xf]
          %v1626 = vld [vmem:[%s4 + $0x1e8] sm:$0xf]
          %v1627 = vld [vmem:[%s4 + $0x1ec] sm:$0xf]
          %v1628 = vld [vmem:[%s4 + $0x1f0] sm:$0xf]
          %v1629 = vld [vmem:[%s4 + $0x1f4] sm:$0xf]
          %v1630 = vld [vmem:[%s4 + $0x1f8] sm:$0xf]
          %v1631 = vld [vmem:[%s4 + $0x1fc] sm:$0xf]
          %v1632 = vld [vmem:[#allocation11] sm:$0x1]
          %v1634 = vperm.slane %v1632, 0
          %v1764 = vunpack.c.l.b16 %v1504
          %v1765 = vunpack.c.l.b16 %v1505
          %v1766 = vunpack.c.l.b16 %v1506
          %v1767 = vunpack.c.l.b16 %v1507
          %v1768 = vunpack.c.l.b16 %v1508
          %v1769 = vunpack.c.l.b16 %v1509
          %v1770 = vunpack.c.l.b16 %v1510
          %v1771 = vunpack.c.l.b16 %v1511
          %v1772 = vunpack.c.l.b16 %v1512
          %v1773 = vunpack.c.l.b16 %v1513
          %v1774 = vunpack.c.l.b16 %v1514
          %v1775 = vunpack.c.l.b16 %v1515
          %v1776 = vunpack.c.l.b16 %v1516
          %v1777 = vunpack.c.l.b16 %v1517
          %v1778 = vunpack.c.l.b16 %v1518
          %v1779 = vunpack.c.l.b16 %v1519
          %v1780 = vunpack.c.l.b16 %v1520
          %v1781 = vunpack.c.l.b16 %v1521
          %v1782 = vunpack.c.l.b16 %v1522
          %v1783 = vunpack.c.l.b16 %v1523
          %v1784 = vunpack.c.l.b16 %v1524
          %v1785 = vunpack.c.l.b16 %v1525
          %v1786 = vunpack.c.l.b16 %v1526
          %v1787 = vunpack.c.l.b16 %v1527
          %v1788 = vunpack.c.l.b16 %v1528
          %v1789 = vunpack.c.l.b16 %v1529
          %v1790 = vunpack.c.l.b16 %v1530
          %v1791 = vunpack.c.l.b16 %v1531
          %v1792 = vunpack.c.l.b16 %v1532
          %v1793 = vunpack.c.l.b16 %v1533
          %v1794 = vunpack.c.l.b16 %v1534
          %v1795 = vunpack.c.l.b16 %v1535
          %v1796 = vunpack.c.l.b16 %v1536
          %v1797 = vunpack.c.l.b16 %v1537
          %v1798 = vunpack.c.l.b16 %v1538
          %v1799 = vunpack.c.l.b16 %v1539
          %v1800 = vunpack.c.l.b16 %v1540
          %v1801 = vunpack.c.l.b16 %v1541
          %v1802 = vunpack.c.l.b16 %v1542
          %v1803 = vunpack.c.l.b16 %v1543
          %v1804 = vunpack.c.l.b16 %v1544
          %v1805 = vunpack.c.l.b16 %v1545
          %v1806 = vunpack.c.l.b16 %v1546
          %v1807 = vunpack.c.l.b16 %v1547
          %v1808 = vunpack.c.l.b16 %v1548
          %v1809 = vunpack.c.l.b16 %v1549
          %v1810 = vunpack.c.l.b16 %v1550
          %v1811 = vunpack.c.l.b16 %v1551
          %v1812 = vunpack.c.l.b16 %v1552
          %v1813 = vunpack.c.l.b16 %v1553
          %v1814 = vunpack.c.l.b16 %v1554
          %v1815 = vunpack.c.l.b16 %v1555
          %v1816 = vunpack.c.l.b16 %v1556
          %v1817 = vunpack.c.l.b16 %v1557
          %v1818 = vunpack.c.l.b16 %v1558
          %v1819 = vunpack.c.l.b16 %v1559
          %v1820 = vunpack.c.l.b16 %v1560
          %v1821 = vunpack.c.l.b16 %v1561
          %v1822 = vunpack.c.l.b16 %v1562
          %v1823 = vunpack.c.l.b16 %v1563
          %v1824 = vunpack.c.l.b16 %v1564
          %v1825 = vunpack.c.l.b16 %v1565
          %v1826 = vunpack.c.l.b16 %v1566
          %v1827 = vunpack.c.l.b16 %v1567
          %v1828 = vunpack.c.l.b16 %v1568
          %v1829 = vunpack.c.l.b16 %v1569
          %v1830 = vunpack.c.l.b16 %v1570
          %v1831 = vunpack.c.l.b16 %v1571
          %v1832 = vunpack.c.l.b16 %v1572
          %v1833 = vunpack.c.l.b16 %v1573
          %v1834 = vunpack.c.l.b16 %v1574
          %v1835 = vunpack.c.l.b16 %v1575
          %v1836 = vunpack.c.l.b16 %v1576
          %v1837 = vunpack.c.l.b16 %v1577
          %v1838 = vunpack.c.l.b16 %v1578
          %v1839 = vunpack.c.l.b16 %v1579
          %v1840 = vunpack.c.l.b16 %v1580
          %v1841 = vunpack.c.l.b16 %v1581
          %v1842 = vunpack.c.l.b16 %v1582
          %v1843 = vunpack.c.l.b16 %v1583
          %v1844 = vunpack.c.l.b16 %v1584
          %v1845 = vunpack.c.l.b16 %v1585
          %v1846 = vunpack.c.l.b16 %v1586
          %v1847 = vunpack.c.l.b16 %v1587
          %v1848 = vunpack.c.l.b16 %v1588
          %v1849 = vunpack.c.l.b16 %v1589
          %v1850 = vunpack.c.l.b16 %v1590
          %v1851 = vunpack.c.l.b16 %v1591
          %v1852 = vunpack.c.l.b16 %v1592
          %v1853 = vunpack.c.l.b16 %v1593
          %v1854 = vunpack.c.l.b16 %v1594
          %v1855 = vunpack.c.l.b16 %v1595
          %v1856 = vunpack.c.l.b16 %v1596
          %v1857 = vunpack.c.l.b16 %v1597
          %v1858 = vunpack.c.l.b16 %v1598
          %v1859 = vunpack.c.l.b16 %v1599
          %v1860 = vunpack.c.l.b16 %v1600
          %v1861 = vunpack.c.l.b16 %v1601
          %v1862 = vunpack.c.l.b16 %v1602
          %v1863 = vunpack.c.l.b16 %v1603
          %v1864 = vunpack.c.l.b16 %v1604
          %v1865 = vunpack.c.l.b16 %v1605
          %v1866 = vunpack.c.l.b16 %v1606
          %v1867 = vunpack.c.l.b16 %v1607
          %v1868 = vunpack.c.l.b16 %v1608
          %v1869 = vunpack.c.l.b16 %v1609
          %v1870 = vunpack.c.l.b16 %v1610
          %v1871 = vunpack.c.l.b16 %v1611
          %v1872 = vunpack.c.l.b16 %v1612
          %v1873 = vunpack.c.l.b16 %v1613
          %v1874 = vunpack.c.l.b16 %v1614
          %v1875 = vunpack.c.l.b16 %v1615
          %v1876 = vunpack.c.l.b16 %v1616
          %v1877 = vunpack.c.l.b16 %v1617
          %v1878 = vunpack.c.l.b16 %v1618
          %v1879 = vunpack.c.l.b16 %v1619
          %v1880 = vunpack.c.l.b16 %v1620
          %v1881 = vunpack.c.l.b16 %v1621
          %v1882 = vunpack.c.l.b16 %v1622
          %v1883 = vunpack.c.l.b16 %v1623
          %v1884 = vunpack.c.l.b16 %v1624
          %v1885 = vunpack.c.l.b16 %v1625
          %v1886 = vunpack.c.l.b16 %v1626
          %v1887 = vunpack.c.l.b16 %v1627
          %v1888 = vunpack.c.l.b16 %v1628
          %v1889 = vunpack.c.l.b16 %v1629
          %v1890 = vunpack.c.l.b16 %v1630
          %v1891 = vunpack.c.l.b16 %v1631
          %v1892 = vpack.c.b16 %v1765, %v1764
          %v1893 = vpack.c.b16 %v1767, %v1766
          %v1894 = vpack.c.b16 %v1769, %v1768
          %v1895 = vpack.c.b16 %v1771, %v1770
          %v1896 = vpack.c.b16 %v1773, %v1772
          %v1897 = vpack.c.b16 %v1775, %v1774
          %v1898 = vpack.c.b16 %v1777, %v1776
          %v1899 = vpack.c.b16 %v1779, %v1778
          %v1900 = vpack.c.b16 %v1781, %v1780
          %v1901 = vpack.c.b16 %v1783, %v1782
          %v1902 = vpack.c.b16 %v1785, %v1784
          %v1903 = vpack.c.b16 %v1787, %v1786
          %v1904 = vpack.c.b16 %v1789, %v1788
          %v1905 = vpack.c.b16 %v1791, %v1790
          %v1906 = vpack.c.b16 %v1793, %v1792
          %v1907 = vpack.c.b16 %v1795, %v1794
          %v1908 = vpack.c.b16 %v1797, %v1796
          %v1909 = vpack.c.b16 %v1799, %v1798
          %v1910 = vpack.c.b16 %v1801, %v1800
          %v1911 = vpack.c.b16 %v1803, %v1802
          %v1912 = vpack.c.b16 %v1805, %v1804
          %v1913 = vpack.c.b16 %v1807, %v1806
          %v1914 = vpack.c.b16 %v1809, %v1808
          %v1915 = vpack.c.b16 %v1811, %v1810
          %v1916 = vpack.c.b16 %v1813, %v1812
          %v1917 = vpack.c.b16 %v1815, %v1814
          %v1918 = vpack.c.b16 %v1817, %v1816
          %v1919 = vpack.c.b16 %v1819, %v1818
          %v1920 = vpack.c.b16 %v1821, %v1820
          %v1921 = vpack.c.b16 %v1823, %v1822
          %v1922 = vpack.c.b16 %v1825, %v1824
          %v1923 = vpack.c.b16 %v1827, %v1826
          %v1924 = vpack.c.b16 %v1829, %v1828
          %v1925 = vpack.c.b16 %v1831, %v1830
          %v1926 = vpack.c.b16 %v1833, %v1832
          %v1927 = vpack.c.b16 %v1835, %v1834
          %v1928 = vpack.c.b16 %v1837, %v1836
          %v1929 = vpack.c.b16 %v1839, %v1838
          %v1930 = vpack.c.b16 %v1841, %v1840
          %v1931 = vpack.c.b16 %v1843, %v1842
          %v1932 = vpack.c.b16 %v1845, %v1844
          %v1933 = vpack.c.b16 %v1847, %v1846
          %v1934 = vpack.c.b16 %v1849, %v1848
          %v1935 = vpack.c.b16 %v1851, %v1850
          %v1936 = vpack.c.b16 %v1853, %v1852
          %v1937 = vpack.c.b16 %v1855, %v1854
          %v1938 = vpack.c.b16 %v1857, %v1856
          %v1939 = vpack.c.b16 %v1859, %v1858
          %v1940 = vpack.c.b16 %v1861, %v1860
          %v1941 = vpack.c.b16 %v1863, %v1862
          %v1942 = vpack.c.b16 %v1865, %v1864
          %v1943 = vpack.c.b16 %v1867, %v1866
          %v1944 = vpack.c.b16 %v1869, %v1868
          %v1945 = vpack.c.b16 %v1871, %v1870
          %v1946 = vpack.c.b16 %v1873, %v1872
          %v1947 = vpack.c.b16 %v1875, %v1874
          %v1948 = vpack.c.b16 %v1877, %v1876
          %v1949 = vpack.c.b16 %v1879, %v1878
          %v1950 = vpack.c.b16 %v1881, %v1880
          %v1951 = vpack.c.b16 %v1883, %v1882
          %v1952 = vpack.c.b16 %v1885, %v1884
          %v1953 = vpack.c.b16 %v1887, %v1886
          %v1954 = vpack.c.b16 %v1889, %v1888
          %v1955 = vpack.c.b16 %v1891, %v1890
          %2020 = vmatpush.bf16.msra.mxu0 %v1899
          %2021 = vmatpush.bf16.msra.mxu0 %v1898
          %2022 = vmatpush.bf16.msra.mxu0 %v1897
          %2023 = vmatpush.bf16.msra.mxu0 %v1896
          %2024 = vmatpush.bf16.msra.mxu0 %v1895
          %2025 = vmatpush.bf16.msra.mxu0 %v1894
          %2026 = vmatpush.bf16.msra.mxu0 %v1893
          %2027 = vmatpush.bf16.msra.mxu0 %v1892
          %2028 = vmatmul.bf16.gmra.mxu0 %v1496
          %v2029 = vpop.f32.mrf.mxu0
          %v2030 = vadd.f32 %v1634, %v2029
          %v2031 = vpop.f32.mrf.mxu0
          %2032 = vdwg.mxu0
          %2033 = vmatpush.bf16.msra.mxu0 %v1907
          %2034 = vmatpush.bf16.msra.mxu0 %v1906
          %2035 = vmatpush.bf16.msra.mxu0 %v1905
          %2036 = vmatpush.bf16.msra.mxu0 %v1904
          %2037 = vmatpush.bf16.msra.mxu0 %v1903
          %2038 = vmatpush.bf16.msra.mxu0 %v1902
          %2039 = vmatpush.bf16.msra.mxu0 %v1901
          %2040 = vmatpush.bf16.msra.mxu0 %v1900
          %2041 = vmatmul.bf16.gmra.mxu0 %v1497
          %v2042 = vpop.f32.mrf.mxu0
          %v2043 = vadd.f32 %v2030, %v2042
          %v2044 = vpop.f32.mrf.mxu0
          %2045 = vdwg.mxu0
          %2046 = vmatpush.bf16.msra.mxu0 %v1915
          %2047 = vmatpush.bf16.msra.mxu0 %v1914
          %2048 = vmatpush.bf16.msra.mxu0 %v1913
          %2049 = vmatpush.bf16.msra.mxu0 %v1912
          %2050 = vmatpush.bf16.msra.mxu0 %v1911
          %2051 = vmatpush.bf16.msra.mxu0 %v1910
          %2052 = vmatpush.bf16.msra.mxu0 %v1909
          %2053 = vmatpush.bf16.msra.mxu0 %v1908
          %2054 = vmatmul.bf16.gmra.mxu0 %v1498
          %v2055 = vpop.f32.mrf.mxu0
          %v2056 = vadd.f32 %v2043, %v2055
          %v2057 = vpop.f32.mrf.mxu0
          %2058 = vdwg.mxu0
          %2059 = vmatpush.bf16.msra.mxu0 %v1923
          %2060 = vmatpush.bf16.msra.mxu0 %v1922
          %2061 = vmatpush.bf16.msra.mxu0 %v1921
          %2062 = vmatpush.bf16.msra.mxu0 %v1920
          %2063 = vmatpush.bf16.msra.mxu0 %v1919
          %2064 = vmatpush.bf16.msra.mxu0 %v1918
          %2065 = vmatpush.bf16.msra.mxu0 %v1917
          %2066 = vmatpush.bf16.msra.mxu0 %v1916
          %2067 = vmatmul.bf16.gmra.mxu0 %v1499
          %v2068 = vpop.f32.mrf.mxu0
          %v2069 = vadd.f32 %v2056, %v2068
          %v2070 = vpop.f32.mrf.mxu0
          %2071 = vdwg.mxu0
          %2072 = vmatpush.bf16.msra.mxu0 %v1931
          %2073 = vmatpush.bf16.msra.mxu0 %v1930
          %2074 = vmatpush.bf16.msra.mxu0 %v1929
          %2075 = vmatpush.bf16.msra.mxu0 %v1928
          %2076 = vmatpush.bf16.msra.mxu0 %v1927
          %2077 = vmatpush.bf16.msra.mxu0 %v1926
          %2078 = vmatpush.bf16.msra.mxu0 %v1925
          %2079 = vmatpush.bf16.msra.mxu0 %v1924
          %2080 = vmatmul.bf16.gmra.mxu0 %v1500
          %v2081 = vpop.f32.mrf.mxu0
          %v2082 = vadd.f32 %v2069, %v2081
          %v2083 = vpop.f32.mrf.mxu0
          %2084 = vdwg.mxu0
          %2085 = vmatpush.bf16.msra.mxu0 %v1939
          %2086 = vmatpush.bf16.msra.mxu0 %v1938
          %2087 = vmatpush.bf16.msra.mxu0 %v1937
          %2088 = vmatpush.bf16.msra.mxu0 %v1936
          %2089 = vmatpush.bf16.msra.mxu0 %v1935
          %2090 = vmatpush.bf16.msra.mxu0 %v1934
          %2091 = vmatpush.bf16.msra.mxu0 %v1933
          %2092 = vmatpush.bf16.msra.mxu0 %v1932
          %2093 = vmatmul.bf16.gmra.mxu0 %v1501
          %v2094 = vpop.f32.mrf.mxu0
          %v2095 = vadd.f32 %v2082, %v2094
          %v2096 = vpop.f32.mrf.mxu0
          %2097 = vdwg.mxu0
          %2098 = vmatpush.bf16.msra.mxu0 %v1947
          %2099 = vmatpush.bf16.msra.mxu0 %v1946
          %2100 = vmatpush.bf16.msra.mxu0 %v1945
          %2101 = vmatpush.bf16.msra.mxu0 %v1944
          %2102 = vmatpush.bf16.msra.mxu0 %v1943
          %2103 = vmatpush.bf16.msra.mxu0 %v1942
          %2104 = vmatpush.bf16.msra.mxu0 %v1941
          %2105 = vmatpush.bf16.msra.mxu0 %v1940
          %2106 = vmatmul.bf16.gmra.mxu0 %v1502
          %v2107 = vpop.f32.mrf.mxu0
          %v2108 = vadd.f32 %v2095, %v2107
          %v2109 = vpop.f32.mrf.mxu0
          %2110 = vdwg.mxu0
          %2111 = vmatpush.bf16.msra.mxu0 %v1955
          %2112 = vmatpush.bf16.msra.mxu0 %v1954
          %2113 = vmatpush.bf16.msra.mxu0 %v1953
          %2114 = vmatpush.bf16.msra.mxu0 %v1952
          %2115 = vmatpush.bf16.msra.mxu0 %v1951
          %2116 = vmatpush.bf16.msra.mxu0 %v1950
          %2117 = vmatpush.bf16.msra.mxu0 %v1949
          %2118 = vmatpush.bf16.msra.mxu0 %v1948
          %2119 = vmatmul.bf16.gmra.mxu0 %v1503
          %v2120 = vpop.f32.mrf.mxu0
          %v2121 = vadd.f32 %v2108, %v2120
          %v2122 = vpop.f32.mrf.mxu0
          %2123 = vdwg.mxu0
          %2125 = vrot.lane.b32.xlu0 %v2121, 127
          %v2126 = vpop.permute.xlu0 %2125
          %v2128 = vsub.f32 %v2121, %v2126
          %v2129 = vsub.f32 0.0, %v2128
          %v2130 = vmul.f32 %v2129, 1.442695
          %v2131 = vpow.pop %v2130
          %v2132 = vadd.f32 %v2131, 1.0
          %v2133 = vrcp.pop %v2132
          %v2134 = vmul.f32 %v2132, %v2133
          %v2135 = vsub.f32 1.0, %v2134
          %v2136 = vmul.f32 %v2133, %v2135
          %v2137 = vadd.f32 %v2133, %v2136
          %vm2138 = vweird.f32 %v2132
          %vm2139 = vweird.f32 %v2133
          %vm2140 = vmor %vm2138, %vm2139
          %v2141 = vsel %vm2140, %v2133, %v2137
          %v2142 = vand.u32 2147483647, %v2132
          %vm2143 = vcmp.eq.f32.partialorder %v2142, 8.507059e+37
          %v2144 = vand.u32 %v2132, 2147483648
          %v2145 = vor.u32 1.1754944e-38, %v2144
          %v2146 = vsel %vm2143, %v2145, %v2141
          %v2147 = vmul.f32 1.0, %v2146
          %v2148 = vsub.f32 0.0, %v2129
          %v2149 = vmul.f32 %v2148, 1.442695
          %v2150 = vpow.pop %v2149
          %v2151 = vadd.f32 %v2150, 1.0
          %v2152 = vrcp.pop %v2151
          %v2153 = vmul.f32 %v2151, %v2152
          %v2154 = vsub.f32 1.0, %v2153
          %v2155 = vmul.f32 %v2152, %v2154
          %v2156 = vadd.f32 %v2152, %v2155
          %vm2157 = vweird.f32 %v2151
          %vm2158 = vweird.f32 %v2152
          %vm2159 = vmor %vm2157, %vm2158
          %v2160 = vsel %vm2159, %v2152, %v2156
          %v2161 = vand.u32 2147483647, %v2151
          %vm2162 = vcmp.eq.f32.partialorder %v2161, 8.507059e+37
          %v2163 = vand.u32 %v2151, 2147483648
          %v2164 = vor.u32 1.1754944e-38, %v2163
          %v2165 = vsel %vm2162, %v2164, %v2160
          %v2166 = vmul.f32 1.0, %v2165
          %2168 = vrot.lane.b32.xlu0 %v2166, 1
          %v2169 = vpop.permute.xlu0 %2168
          %vm2171 = vcmask 7168
          %v2172 = vsel %vm2171, %v2147, %v2169
          %vm2173 = vcmask 15360
          %v2174 = vsel %vm2173, %v2172, %v2147
          %vm2175 = vcmask 23552
          %v2176 = vsel %vm2175, %v2174, %v2169
          %vm2177 = vcmask 31744
          %v2178 = vsel %vm2177, %v2176, 0.0
          %2179 = vst [vmem:[%s424] sm:$0xff] %v2178
          %2180 = vrot.lane.b32.xlu0 %v2121, 123
          %v2181 = vpop.permute.xlu0 %2180
          %2183 = vxpose.xlu0.b32.start [1/16] %v2181, 128
          %2184 = vxpose.xlu0.b32.cont [2/16] 0.0, 128
          %2185 = vxpose.xlu0.b32.cont [3/16] 0.0, 128
          %2186 = vxpose.xlu0.b32.cont [4/16] 0.0, 128
          %2187 = vxpose.xlu0.b32.cont [5/16] 0.0, 128
          %2188 = vxpose.xlu0.b32.cont [6/16] 0.0, 128
          %2189 = vxpose.xlu0.b32.cont [7/16] 0.0, 128
          %2190 = vxpose.xlu0.b32.cont [8/16] 0.0, 128
          %2191 = vxpose.xlu0.b32.cont [9/16] 0.0, 128
          %2192 = vxpose.xlu0.b32.cont [10/16] 0.0, 128
          %2193 = vxpose.xlu0.b32.cont [11/16] 0.0, 128
          %2194 = vxpose.xlu0.b32.cont [12/16] 0.0, 128
          %2195 = vxpose.xlu0.b32.cont [13/16] 0.0, 128
          %2196 = vxpose.xlu0.b32.cont [14/16] 0.0, 128
          %2197 = vxpose.xlu0.b32.cont [15/16] 0.0, 128
          %2198 = vxpose.xlu0.b32.end [16/16] 0.0, 128
          %v2199 = vpop.trf.xlu0
          %v2200 = vpop.trf.xlu0
          %v2201 = vpop.trf.xlu0
          %v2202 = vpop.trf.xlu0
          %v2203 = vpop.trf.xlu0
          %v2204 = vpop.trf.xlu0
          %v2205 = vpop.trf.xlu0
          %v2206 = vpop.trf.xlu0
          %v2207 = vpop.trf.xlu0
          %v2208 = vpop.trf.xlu0
          %v2209 = vpop.trf.xlu0
          %v2210 = vpop.trf.xlu0
          %v2211 = vpop.trf.xlu0
          %v2212 = vpop.trf.xlu0
          %v2213 = vpop.trf.xlu0
          %v2214 = vpop.trf.xlu0
          %2215 = vset.pattern.permute.xlu0 4
          %2216 = vperm.xlu0 %2215, %v2121
          %v2217 = vpop.permute.xlu0 %2216
          %v2219 = vperm.slane %v2199, 0
          %v2220 = vadd.f32 %v2217, %v2219
          %v2221 = vld [vmem:[%s365] sm:$0xff]
          %vm2222 = vcmp.eq.f32.partialorder %v2221, 0.0
          %v2223 = vsel %vm2222, -1e+30, %v2220
          %vm2224 = vcmask 64512
          %v2225 = vsel %vm2224, %v2223, -inf
          %2226 = vmax.xlane.f32.xlu0 %v2225
          %v2227 = vpop.xlane.xlu0 %2226
          %v2228 = vsub.f32 %v2223, %v2227
          %v2229 = vmul.f32 %v2228, 1.442695
          %v2230 = vpow.pop %v2229
          %v2231 = vsel %vm2224, %v2230, 0.0
          %2232 = vadd.xlane.f32.xlu0 %v2231
          %v2233 = vpop.xlane.xlu0 %2232
          %v2234 = vrcp.pop %v2233
          %v2235 = vmul.f32 %v2233, %v2234
          %v2236 = vsub.f32 1.0, %v2235
          %v2237 = vmul.f32 %v2234, %v2236
          %v2238 = vadd.f32 %v2234, %v2237
          %vm2239 = vweird.f32 %v2233
          %vm2240 = vweird.f32 %v2234
          %vm2241 = vmor %vm2239, %vm2240
          %v2242 = vsel %vm2241, %v2234, %v2238
          %v2243 = vand.u32 2147483647, %v2233
          %vm2244 = vcmp.eq.f32.partialorder %v2243, 8.507059e+37
          %v2245 = vand.u32 %v2233, 2147483648
          %v2246 = vor.u32 1.1754944e-38, %v2245
          %v2247 = vsel %vm2244, %v2246, %v2242
          %v2248 = vmul.f32 %v2230, %v2247
          %2249 = vst.msk [vmem:[%s431] sm:$0xff] %vm2224, %v2248
        $region72: #{tpu_custom_call.1} parent=43 // pred_fallthru
          _
        %s2250 = sand.u32 %s195, 1
        %s2251 = scalar_lea.sflag [#allocation5], %s2250
        %s2252 = sand.u32 %s195, 1
        %s2253 = smul.addr %s2252, 8
        %s2254 = scalar_lea.vmem [#allocation12], %s2253
        %s2255 = sand.u32 %s221, 1
        %s2256 = scalar_lea.sflag [#allocation14], %s2255
        %s2257 = sand.u32 %s221, 1
        %s2258 = smul.addr %s2257, 8
        %s2259 = scalar_lea.vmem [#allocation13], %s2258
        // Predicated region
        $region73: #{tpu_custom_call.1} parent=43 // pred_check
          %p2260 = pneg %p205
        $region74: #{tpu_custom_call.1} parent=43 // pred_check_branch
          %2262 = sbr.rel (%p2260) target = $region76
        $region75: #{tpu_custom_call.1} parent=43 // pred_region
          %2264 = vsyncadd %s2251, 0
          %s2265 = smul.addr %s36, 8
          %s2266 = scalar_lea.hbm %s6, %s2265
          %s2268 = sshll.u32 %s2254, 4
          %s2269 = int_to_ptr.vmem [resolvable:$true] %s2268
          %s2270 = sshll.u32 %s2266, 4
          %s2271 = int_to_ptr.hbm [resolvable:$true] %s2270
          %2273 = dma.vmem_to_hbm [thread:$0]  %s2269, 128, %s2271, %s2251
        $region76: #{tpu_custom_call.1} parent=43 // pred_fallthru
          _
        // Predicated region
        $region77: #{tpu_custom_call.1} parent=43 // pred_check
          %p2274 = pneg %p231
        $region78: #{tpu_custom_call.1} parent=43 // pred_check_branch
          %2276 = sbr.rel (%p2274) target = $region80
        $region79: #{tpu_custom_call.1} parent=43 // pred_region
          %2278 = vsyncadd %s2256, 0
          %s2279 = smul.addr %s36, 8
          %s2280 = scalar_lea.hbm %s7, %s2279
          %s2282 = sshll.u32 %s2259, 4
          %s2283 = int_to_ptr.vmem [resolvable:$true] %s2282
          %s2284 = sshll.u32 %s2280, 4
          %s2285 = int_to_ptr.hbm [resolvable:$true] %s2284
          %2287 = dma.vmem_to_hbm [thread:$0]  %s2283, 128, %s2285, %s2256
        $region80: #{tpu_custom_call.1} parent=43 // pred_fallthru
          _
      $region44: #{tpu_custom_call.1} parent=5 // pred_fallthru
        _
      %p2288 = scmp.le.s32.totalorder 2, %s27
      // Predicated region
      $region81: #{tpu_custom_call.1} parent=5 // pred_check
        %p2289 = pneg %p2288
      $region82: #{tpu_custom_call.1} parent=5 // pred_check_branch
        %2291 = sbr.rel (%p2289) target = $region84
      $region83: #{tpu_custom_call.1} parent=5 // pred_region
        %s2292 = ssub.s32 %s27, 2
        // Predicated region
        $region85: #{tpu_custom_call.1} parent=83 // pred_check
          %p2293 = pneg %p211
        $region86: #{tpu_custom_call.1} parent=83 // pred_check_branch
          %2295 = sbr.rel (%p2293) target = $region88
        $region87: #{tpu_custom_call.1} parent=83 // pred_region
          %s2296 = sand.u32 %s196, 1
          %s2297 = scalar_lea.sflag [#allocation5], %s2296
          %s2298 = sand.u32 %s196, 1
          %s2299 = smul.addr %s2298, 8
          %s2300 = scalar_lea.vmem [#allocation12], %s2299
          %2302 = dma.done %s2297, 128
        $region88: #{tpu_custom_call.1} parent=83 // pred_fallthru
          _
        // Predicated region
        $region89: #{tpu_custom_call.1} parent=83 // pred_check
          %p2303 = pneg %p237
        $region90: #{tpu_custom_call.1} parent=83 // pred_check_branch
          %2305 = sbr.rel (%p2303) target = $region92
        $region91: #{tpu_custom_call.1} parent=83 // pred_region
          %s2306 = sand.u32 %s222, 1
          %s2307 = scalar_lea.sflag [#allocation14], %s2306
          %s2308 = sand.u32 %s222, 1
          %s2309 = smul.addr %s2308, 8
          %s2310 = scalar_lea.vmem [#allocation13], %s2309
          %2312 = dma.done %s2307, 128
        $region92: #{tpu_custom_call.1} parent=83 // pred_fallthru
          _
      $region84: #{tpu_custom_call.1} parent=5 // pred_fallthru
        _
    $region6: #{tpu_custom_call.1} parent=1 // loop_footer
      %s31 = sadd.s32 1, %s27
    $region7: #{tpu_custom_call.1} parent=1 // loop_footer_branch
      %26 = sbr.rel target = $region3
    $region8: #{tpu_custom_call.1} parent=1 // loop_exit
      _
    %2313 = vsyncpa [#allocation4], 1
    %s2314 = scalar_lea.sflag [#allocation4], 1
    %2315 = vsyncpa %s2314, 1
    %2316 = vsyncpa [#allocation7], 1
    %s2317 = scalar_lea.sflag [#allocation7], 1
    %2318 = vsyncpa %s2317, 1
    %2319 = vsyncpa [#allocation10], 1
    %2320 = vsyncpa [#allocation5], 1
    %s2321 = scalar_lea.sflag [#allocation5], 1
    %2322 = vsyncpa %s2321, 1
    %2323 = vsyncpa [#allocation14], 1
    %s2324 = scalar_lea.sflag [#allocation14], 1
    %2325 = vsyncpa %s2324, 1

</llo_original>
